<compile_context>
chip_gen: v7x
topology: tpu7x:2x2x1
jax: 0.10.0
libtpu: 0.0.40
codegen_flags: <defaults>
</compile_context>

<pallas_src>
import functools

import jax
import jax.numpy as jnp
import numpy as np
from jax import lax
from jax.experimental import pallas as pl
from jax.experimental.pallas import tpu as pltpu

EPS = 1e-5  # PyTorch BatchNorm2d default eps

PARAM_ORDER = ('mask', 'dw1', 'w1', 'b1', 'dw2', 'w2', 'b2',
               'dw3', 'w3', 'b3', 'ws', 'bs')

VMEM_SOFT_BUDGET = 24 << 20   # per-step residency target; fits v7x's 64 MiB VMEM


# --------------------------------- kernel ---------------------------------- #
def block_kernel(shifts, x_ref, mask_ref,
                 dw1, w1, b1, dw2, w2, b2, dw3, w3, b3, ws, bs,
                 out_ref):
    """One batch-group of the Block forward.

    x_ref    : (Cin, L)     activations, channels on sublanes, L = Nb*H*W lanes
    mask_ref : (9, 1, L)    shared 0/1 boundary mask per 3x3 tap (all stages)
    dw*      : (9, C, 1)    per-stage depthwise tap weights (f32)
    w*       : (Cout, Cin)  folded pointwise weights (both BN scales folded in)
    b*       : (Cout, 1)    folded per-stage bias (f32)
    ws, bs   : skip 1x1 conv + skip BN, folded the same way
    """
    x = x_ref[...]                                       # (Cin, L) f32

    def stage(y, dw_ref, w_ref, b_ref):
        y = jnp.maximum(y, 0.0)                          # ReLU (VPU, f32)
        # 3x3 depthwise conv = 9 static XLU lane-rolls.  Boundary handling via
        # the shared per-lane mask * per-channel tap weight (factorized, so no
        # (9, C, L) tensor is ever materialized).  Two partial accumulators
        # shorten the dependent VALU chain.
        acc_a = dw_ref[4] * y                            # center tap: mask == 1
        acc_b = jnp.zeros_like(acc_a)
        flip = False
        for k in range(9):
            if k == 4:
                continue
            t = pltpu.roll(y, shift=shifts[k], axis=1)   # XLU lane rotate
            tap = dw_ref[k] * (mask_ref[k] * t)
            if flip:
                acc_b = acc_b + tap
            else:
                acc_a = acc_a + tap
            flip = not flip
        acc = acc_a + acc_b
        # pointwise 1x1 conv + folded BNs: one MXU matmul (bf16-in / f32-acc by
        # default) + one bias add
        wm = w_ref[...]
        return jnp.dot(wm, acc.astype(wm.dtype),
                       preferred_element_type=jnp.float32) + b_ref[...]

    y = stage(x, dw1, w1, b1)                            # relu -> sep1 -> bn1
    y = stage(y, dw2, w2, b2)                            # relu -> sep2 -> bn2
    y = stage(y, dw3, w3, b3)                            # relu -> sep3 -> bn3

    wskip = ws[...]
    skip = jnp.dot(wskip, x.astype(wskip.dtype),
                   preferred_element_type=jnp.float32) + bs[...]
    out_ref[...] = y + skip                              # lane-dense store


# --------------------------- parameter preparation -------------------------- #
def _tap_masks(H, W, dilation, images_per_block):
    """(9, images_per_block*H*W) f32 validity masks ('same' pad = dilation)."""
    hh, ww = np.meshgrid(np.arange(H), np.arange(W), indexing='ij')
    masks = []
    for kh in range(3):
        for kw in range(3):
            dh = (kh - 1) * dilation
            dw = (kw - 1) * dilation
            m = ((hh + dh >= 0) & (hh + dh < H) &
                 (ww + dw >= 0) & (ww + dw < W)).astype(np.float32)
            masks.append(np.tile(m.reshape(-1), images_per_block))
    return jnp.asarray(np.stack(masks))                  # (9, Lblk)


def to_kernel_params(p, H, W, dilation, images_per_block, mxu_dtype):
    kp = {}
    # One boundary mask shared by all three stages and all channels.
    kp['mask'] = _tap_masks(H, W, dilation, images_per_block)[:, None, :]

    def fold_bn(bn):
        scale = bn['gamma'] / jnp.sqrt(bn['var'] + EPS)
        bias = bn['beta'] - bn['mean'] * scale
        return scale, bias

    def dw_taps(dw_w):                    # torch depthwise weight (C, 1, 3, 3)
        w9 = dw_w[:, 0].reshape(dw_w.shape[0], 9)        # (C, 9), k = kh*3+kw
        return jnp.transpose(w9)[:, :, None]             # (9, C, 1) f32

    def fold_stage(pw, sep_bn, blk_bn):
        # sepconv: dw -> bn(sd,bd) -> 1x1 pw ; then block bn(s,b)
        sd, bd = fold_bn(sep_bn)
        s, b = fold_bn(blk_bn)
        w = (s[:, None] * pw * sd[None, :]).astype(mxu_dtype)   # (Cout, Cin)
        bias = (s * (pw @ bd) + b)[:, None]                     # (Cout, 1) f32
        return w, bias

    kp['dw1'] = dw_taps(p['sep1_dw'])
    kp['w1'], kp['b1'] = fold_stage(p['sep1_pw'], p['sep1_bn'], p['bn1'])
    kp['dw2'] = dw_taps(p['sep2_dw'])
    kp['w2'], kp['b2'] = fold_stage(p['sep2_pw'], p['sep2_bn'], p['bn2'])
    kp['dw3'] = dw_taps(p['sep3_dw'])
    kp['w3'], kp['b3'] = fold_stage(p['sep3_pw'], p['sep3_bn'], p['bn3'])
    ss, bsb = fold_bn(p['skip_bn'])
    kp['ws'] = (ss[:, None] * p['skip_w']).astype(mxu_dtype)    # (Cout, Cin)
    kp['bs'] = bsb[:, None]                                     # (Cout, 1)
    return kp


# ------------------------------ tiling heuristics --------------------------- #
def _round_up(x, m):
    return (x + m - 1) // m * m


def _estimate_vmem_bytes(Cin, Cout, Lblk, mxu_bytes):
    f32 = 4
    act = 2 * (Cin + Cout) * Lblk * f32                  # in/out tiles, 2 buffers
    mask = 2 * 9 * Lblk * f32                            # grid-invariant, 2 buffers
    dw = 2 * 3 * 9 * _round_up(max(Cin, Cout), 8) * 128 * f32
    w = 2 * 2 * _round_up(Cout, 8) * (_round_up(Cin, 128)
                                      + _round_up(Cout, 128)) * mxu_bytes
    b = 2 * 4 * _round_up(Cout, 8) * 128 * f32
    return act + mask + dw + w + b


def _choose_images_per_step(N, HW, Cin, Cout, mxu_bytes, target_lanes=4096):
    divs = [d for d in range(1, N + 1) if N % d == 0]
    fits = [d for d in divs
            if _estimate_vmem_bytes(Cin, Cout, d * HW, mxu_bytes)
            <= VMEM_SOFT_BUDGET] or [1]
    cand = [d for d in fits if d * HW <= target_lanes] or [min(fits)]
    d = max(cand)                              # biggest lane tile near the target
    if N // d < 2:
        # v7x megacore: prefer >=2 grid steps when the tile can stay >=2048
        # lanes, or when the whole problem is tiny anyway (overhead-bound either
        # way, but then both TensorCores get work).
        alt = [e for e in fits if N // e >= 2]
        if alt:
            e = max(alt)
            if e * HW >= 2048 or d * HW < 2048:
                d = e
    return d


# --------------------------------- wrapper ---------------------------------- #
def block_forward_pallas(x_nchw, params, dilation=1, images_per_step=None,
                         mxu_dtype=jnp.bfloat16):
    N, Cin, H, W = x_nchw.shape
    Cout = params['sep1_pw'].shape[0]
    HW = H * W
    mxu_bytes = jnp.dtype(mxu_dtype).itemsize

    if images_per_step is None:
        images_per_step = _choose_images_per_step(N, HW, Cin, Cout, mxu_bytes)
    assert N % images_per_step == 0
    Lblk = images_per_step * HW
    assert Lblk % 128 == 0, "lane tile must be a multiple of 128"
    L = N * HW

    kp = to_kernel_params(params, H, W, dilation, images_per_step, mxu_dtype)
    plist = [kp[k] for k in PARAM_ORDER]

    # static roll amounts per 3x3 tap (flattened h*W + w offset)
    shifts = []
    for kh in range(3):
        for kw in range(3):
            delta = (kh - 1) * dilation * W + (kw - 1) * dilation
            shifts.append((-delta) % Lblk)
    shifts = tuple(shifts)

    # channels-major slab: (Cin, N*H*W); lanes (last dim) fully dense.
    x2d = jnp.transpose(x_nchw, (1, 0, 2, 3)).reshape(Cin, L)

    # TODO(synk): single-buffer the grid-invariant parameter inputs
    # (pipeline_mode=pl.Buffered(1)) once validated on the target jax release;
    # after the tap-factor factorization they are small, so default
    # double-buffering costs little at these channel counts.
    in_specs = [pl.BlockSpec((Cin, Lblk), lambda g: (0, g))]
    in_specs += [pl.BlockSpec(p.shape, lambda g, _nd=p.ndim: (0,) * _nd)
                 for p in plist]
    out_spec = pl.BlockSpec((Cout, Lblk), lambda g: (0, g))

    est = _estimate_vmem_bytes(Cin, Cout, Lblk, mxu_bytes)
    vmem_limit = int(min(max(est + (8 << 20), 32 << 20), 48 << 20))

    out2d = pl.pallas_call(
        functools.partial(block_kernel, shifts),
        out_shape=jax.ShapeDtypeStruct((Cout, L), jnp.float32),
        grid=(N // images_per_step,),
        in_specs=in_specs,
        out_specs=out_spec,
        compiler_params=pltpu.CompilerParams(
            dimension_semantics=("parallel",),   # v7x: shard batch over 2 TCs
            vmem_limit_bytes=vmem_limit),
    )(x2d, *plist)

    # back to NCHW (pure layout plumbing outside the kernel)
    return jnp.transpose(out2d.reshape(Cout, N, H, W), (1, 0, 2, 3))


# ----------------------- deterministic parameter init ---------------------- #
def init_params(key, cin, cout):
    keys = iter(jax.random.split(key, 64))

    def nrm(shape, scale=0.3):
        return scale * jax.random.normal(next(keys), shape, jnp.float32)

    def bn_params(c):
        return dict(
            gamma=1.0 + 0.1 * jax.random.normal(next(keys), (c,), jnp.float32),
            beta=0.1 * jax.random.normal(next(keys), (c,), jnp.float32),
            mean=0.1 * jax.random.normal(next(keys), (c,), jnp.float32),
            var=0.5 + jax.random.uniform(next(keys), (c,), jnp.float32))

    p = {}
    p['sep1_dw'] = nrm((cin, 1, 3, 3));  p['sep1_bn'] = bn_params(cin)
    p['sep1_pw'] = nrm((cout, cin));     p['bn1'] = bn_params(cout)
    p['sep2_dw'] = nrm((cout, 1, 3, 3)); p['sep2_bn'] = bn_params(cout)
    p['sep2_pw'] = nrm((cout, cout));    p['bn2'] = bn_params(cout)
    p['sep3_dw'] = nrm((cout, 1, 3, 3)); p['sep3_bn'] = bn_params(cout)
    p['sep3_pw'] = nrm((cout, cout));    p['bn3'] = bn_params(cout)
    p['skip_w'] = nrm((cout, cin));      p['skip_bn'] = bn_params(cout)
    return p


# ------------------------------ pure-JAX reference -------------------------- #
def block_forward_reference(x_nchw, p, dilation=1):
    def bn(y, bp):
        scale = bp['gamma'] / jnp.sqrt(bp['var'] + EPS)
        bias = bp['beta'] - bp['mean'] * scale
        return y * scale[None, :, None, None] + bias[None, :, None, None]

    def dwconv(y, w, d):
        c = y.shape[1]
        pad = d  # SeparableConv2d padding rule (kernel_size=3, dilation>=1)
        return lax.conv_general_dilated(
            y, w, (1, 1), ((pad, pad), (pad, pad)), rhs_dilation=(d, d),
            dimension_numbers=('NCHW', 'OIHW', 'NCHW'),
            feature_group_count=c, precision=lax.Precision.HIGHEST)

    def pwconv(y, w):  # w: (Cout, Cin)
        return jnp.einsum('nchw,oc->nohw', y, w, precision=lax.Precision.HIGHEST)

    y = jax.nn.relu(x_nchw)
    y = dwconv(y, p['sep1_dw'], dilation); y = bn(y, p['sep1_bn']); y = pwconv(y, p['sep1_pw'])
    y = bn(y, p['bn1']); y = jax.nn.relu(y)
    y = dwconv(y, p['sep2_dw'], dilation); y = bn(y, p['sep2_bn']); y = pwconv(y, p['sep2_pw'])
    y = bn(y, p['bn2']); y = jax.nn.relu(y)
    y = dwconv(y, p['sep3_dw'], dilation); y = bn(y, p['sep3_bn']); y = pwconv(y, p['sep3_pw'])
    y = bn(y, p['bn3'])
    skip = pwconv(x_nchw, p['skip_w']); skip = bn(skip, p['skip_bn'])
    return y + skip


# ----------------------------------- main ----------------------------------- #
if __name__ == "__main__":
    key = jax.random.PRNGKey(0)
    kx, kparam = jax.random.split(key)

    N, Cin, H, W, Cout = 2, 8, 16, 16, 16          # Block(in=8, out=16), stride=1
    x_nchw = jax.random.normal(kx, (N, Cin, H, W), jnp.float32)
    params = init_params(kparam, Cin, Cout)

    for dilation in (1, 2):
        ref = block_forward_reference(x_nchw, params, dilation=dilation)

        # f32-MXU path (tight tolerance)
        out = block_forward_pallas(x_nchw, params, dilation=dilation,
                                   mxu_dtype=jnp.float32)
        out = jax.block_until_ready(out)
        np.testing.assert_allclose(np.asarray(out), np.asarray(ref),
                                   rtol=5e-3, atol=5e-3)

        # default bf16-in / f32-accumulate MXU path (v5e/v6e/v7x throughput)
        out = block_forward_pallas(x_nchw, params, dilation=dilation)
        out = jax.block_until_ready(out)
        np.testing.assert_allclose(np.asarray(out), np.asarray(ref),
                                   rtol=3e-2, atol=3e-2)
    print("KERNEL_OK")
</pallas_src>

<mosaic_0001>
module attributes {stable_mosaic.version = 11 : i64} {
  func.func @block_kernel(%arg0: i32, %arg1: memref<8x256xf32, #tpu.memory_space<vmem>>, %arg2: memref<9x1x256xf32, #tpu.memory_space<vmem>>, %arg3: memref<9x8x1xf32, #tpu.memory_space<vmem>>, %arg4: memref<16x8xf32, #tpu.memory_space<vmem>>, %arg5: memref<16x1xf32, #tpu.memory_space<vmem>>, %arg6: memref<9x16x1xf32, #tpu.memory_space<vmem>>, %arg7: memref<16x16xf32, #tpu.memory_space<vmem>>, %arg8: memref<16x1xf32, #tpu.memory_space<vmem>>, %arg9: memref<9x16x1xf32, #tpu.memory_space<vmem>>, %arg10: memref<16x16xf32, #tpu.memory_space<vmem>>, %arg11: memref<16x1xf32, #tpu.memory_space<vmem>>, %arg12: memref<16x8xf32, #tpu.memory_space<vmem>>, %arg13: memref<16x1xf32, #tpu.memory_space<vmem>>, %arg14: memref<16x256xf32, #tpu.memory_space<vmem>>) attributes {dimension_semantics = [#tpu.dimension_semantics<parallel>], iteration_bounds = array<i64: 2>, scalar_prefetch = 0 : i64, scratch_operands = 0 : i64, tpu.core_type = #tpu.core_type<tc>, window_params = [{transform_indices = @transform_0, window_bounds = array<i64: 8, 256>}, {pipeline_mode = #tpu.pipeline_mode<synchronous>, transform_indices = @transform_1, window_bounds = array<i64: 9, 1, 256>}, {pipeline_mode = #tpu.pipeline_mode<synchronous>, transform_indices = @transform_2, window_bounds = array<i64: 9, 8, 1>}, {pipeline_mode = #tpu.pipeline_mode<synchronous>, transform_indices = @transform_3, window_bounds = array<i64: 16, 8>}, {pipeline_mode = #tpu.pipeline_mode<synchronous>, transform_indices = @transform_4, window_bounds = array<i64: 16, 1>}, {pipeline_mode = #tpu.pipeline_mode<synchronous>, transform_indices = @transform_5, window_bounds = array<i64: 9, 16, 1>}, {pipeline_mode = #tpu.pipeline_mode<synchronous>, transform_indices = @transform_6, window_bounds = array<i64: 16, 16>}, {pipeline_mode = #tpu.pipeline_mode<synchronous>, transform_indices = @transform_7, window_bounds = array<i64: 16, 1>}, {pipeline_mode = #tpu.pipeline_mode<synchronous>, transform_indices = @transform_8, window_bounds = array<i64: 9, 16, 1>}, {pipeline_mode = #tpu.pipeline_mode<synchronous>, transform_indices = @transform_9, window_bounds = array<i64: 16, 16>}, {pipeline_mode = #tpu.pipeline_mode<synchronous>, transform_indices = @transform_10, window_bounds = array<i64: 16, 1>}, {pipeline_mode = #tpu.pipeline_mode<synchronous>, transform_indices = @transform_11, window_bounds = array<i64: 16, 8>}, {pipeline_mode = #tpu.pipeline_mode<synchronous>, transform_indices = @transform_12, window_bounds = array<i64: 16, 1>}, {transform_indices = @transform_13, window_bounds = array<i64: 16, 256>}]} {
    %c0 = arith.constant 0 : index
    %c0_0 = arith.constant 0 : index
    %0 = vector.load %arg1[%c0, %c0_0] : memref<8x256xf32, #tpu.memory_space<vmem>>, vector<8x256xf32>
    %cst = arith.constant 0.000000e+00 : f32
    %1 = vector.broadcast %cst : f32 to vector<8x256xf32>
    %2 = arith.maximumf %0, %1 : vector<8x256xf32>
    %c4 = arith.constant 4 : index
    %c0_1 = arith.constant 0 : index
    %c0_2 = arith.constant 0 : index
    %3 = vector.load %arg3[%c4, %c0_1, %c0_2] : memref<9x8x1xf32, #tpu.memory_space<vmem>>, vector<1x8x1xf32>
    %4 = vector.shape_cast %3 : vector<1x8x1xf32> to vector<8x1xf32>
    %5 = vector.broadcast %4 : vector<8x1xf32> to vector<8x256xf32>
    %6 = arith.mulf %5, %2 : vector<8x256xf32>
    %cst_3 = arith.constant 0.000000e+00 : f32
    %7 = vector.broadcast %cst_3 : f32 to vector<8x256xf32>
    %c17_i32 = arith.constant 17 : i32
    %8 = tpu.dynamic_rotate %2 by %c17_i32 dim 1 : vector<8x256xf32>, i32 -> vector<8x256xf32>
    %c0_4 = arith.constant 0 : index
    %c0_5 = arith.constant 0 : index
    %c0_6 = arith.constant 0 : index
    %9 = vector.load %arg3[%c0_4, %c0_5, %c0_6] : memref<9x8x1xf32, #tpu.memory_space<vmem>>, vector<1x8x1xf32>
    %10 = vector.shape_cast %9 : vector<1x8x1xf32> to vector<8x1xf32>
    %c0_7 = arith.constant 0 : index
    %c0_8 = arith.constant 0 : index
    %c0_9 = arith.constant 0 : index
    %11 = vector.load %arg2[%c0_7, %c0_8, %c0_9] : memref<9x1x256xf32, #tpu.memory_space<vmem>>, vector<1x1x256xf32>
    %12 = vector.shape_cast %11 : vector<1x1x256xf32> to vector<1x256xf32>
    %13 = vector.broadcast %12 : vector<1x256xf32> to vector<8x256xf32>
    %14 = arith.mulf %13, %8 : vector<8x256xf32>
    %15 = vector.broadcast %10 : vector<8x1xf32> to vector<8x256xf32>
    %16 = arith.mulf %15, %14 : vector<8x256xf32>
    %17 = arith.addf %6, %16 : vector<8x256xf32>
    %c16_i32 = arith.constant 16 : i32
    %18 = tpu.dynamic_rotate %2 by %c16_i32 dim 1 : vector<8x256xf32>, i32 -> vector<8x256xf32>
    %c1 = arith.constant 1 : index
    %c0_10 = arith.constant 0 : index
    %c0_11 = arith.constant 0 : index
    %19 = vector.load %arg3[%c1, %c0_10, %c0_11] : memref<9x8x1xf32, #tpu.memory_space<vmem>>, vector<1x8x1xf32>
    %20 = vector.shape_cast %19 : vector<1x8x1xf32> to vector<8x1xf32>
    %c1_12 = arith.constant 1 : index
    %c0_13 = arith.constant 0 : index
    %c0_14 = arith.constant 0 : index
    %21 = vector.load %arg2[%c1_12, %c0_13, %c0_14] : memref<9x1x256xf32, #tpu.memory_space<vmem>>, vector<1x1x256xf32>
    %22 = vector.shape_cast %21 : vector<1x1x256xf32> to vector<1x256xf32>
    %23 = vector.broadcast %22 : vector<1x256xf32> to vector<8x256xf32>
    %24 = arith.mulf %23, %18 : vector<8x256xf32>
    %25 = vector.broadcast %20 : vector<8x1xf32> to vector<8x256xf32>
    %26 = arith.mulf %25, %24 : vector<8x256xf32>
    %27 = arith.addf %7, %26 : vector<8x256xf32>
    %c15_i32 = arith.constant 15 : i32
    %28 = tpu.dynamic_rotate %2 by %c15_i32 dim 1 : vector<8x256xf32>, i32 -> vector<8x256xf32>
    %c2 = arith.constant 2 : index
    %c0_15 = arith.constant 0 : index
    %c0_16 = arith.constant 0 : index
    %29 = vector.load %arg3[%c2, %c0_15, %c0_16] : memref<9x8x1xf32, #tpu.memory_space<vmem>>, vector<1x8x1xf32>
    %30 = vector.shape_cast %29 : vector<1x8x1xf32> to vector<8x1xf32>
    %c2_17 = arith.constant 2 : index
    %c0_18 = arith.constant 0 : index
    %c0_19 = arith.constant 0 : index
    %31 = vector.load %arg2[%c2_17, %c0_18, %c0_19] : memref<9x1x256xf32, #tpu.memory_space<vmem>>, vector<1x1x256xf32>
    %32 = vector.shape_cast %31 : vector<1x1x256xf32> to vector<1x256xf32>
    %33 = vector.broadcast %32 : vector<1x256xf32> to vector<8x256xf32>
    %34 = arith.mulf %33, %28 : vector<8x256xf32>
    %35 = vector.broadcast %30 : vector<8x1xf32> to vector<8x256xf32>
    %36 = arith.mulf %35, %34 : vector<8x256xf32>
    %37 = arith.addf %17, %36 : vector<8x256xf32>
    %c1_i32 = arith.constant 1 : i32
    %38 = tpu.dynamic_rotate %2 by %c1_i32 dim 1 : vector<8x256xf32>, i32 -> vector<8x256xf32>
    %c3 = arith.constant 3 : index
    %c0_20 = arith.constant 0 : index
    %c0_21 = arith.constant 0 : index
    %39 = vector.load %arg3[%c3, %c0_20, %c0_21] : memref<9x8x1xf32, #tpu.memory_space<vmem>>, vector<1x8x1xf32>
    %40 = vector.shape_cast %39 : vector<1x8x1xf32> to vector<8x1xf32>
    %c3_22 = arith.constant 3 : index
    %c0_23 = arith.constant 0 : index
    %c0_24 = arith.constant 0 : index
    %41 = vector.load %arg2[%c3_22, %c0_23, %c0_24] : memref<9x1x256xf32, #tpu.memory_space<vmem>>, vector<1x1x256xf32>
    %42 = vector.shape_cast %41 : vector<1x1x256xf32> to vector<1x256xf32>
    %43 = vector.broadcast %42 : vector<1x256xf32> to vector<8x256xf32>
    %44 = arith.mulf %43, %38 : vector<8x256xf32>
    %45 = vector.broadcast %40 : vector<8x1xf32> to vector<8x256xf32>
    %46 = arith.mulf %45, %44 : vector<8x256xf32>
    %47 = arith.addf %27, %46 : vector<8x256xf32>
    %c255_i32 = arith.constant 255 : i32
    %48 = tpu.dynamic_rotate %2 by %c255_i32 dim 1 : vector<8x256xf32>, i32 -> vector<8x256xf32>
    %c5 = arith.constant 5 : index
    %c0_25 = arith.constant 0 : index
    %c0_26 = arith.constant 0 : index
    %49 = vector.load %arg3[%c5, %c0_25, %c0_26] : memref<9x8x1xf32, #tpu.memory_space<vmem>>, vector<1x8x1xf32>
    %50 = vector.shape_cast %49 : vector<1x8x1xf32> to vector<8x1xf32>
    %c5_27 = arith.constant 5 : index
    %c0_28 = arith.constant 0 : index
    %c0_29 = arith.constant 0 : index
    %51 = vector.load %arg2[%c5_27, %c0_28, %c0_29] : memref<9x1x256xf32, #tpu.memory_space<vmem>>, vector<1x1x256xf32>
    %52 = vector.shape_cast %51 : vector<1x1x256xf32> to vector<1x256xf32>
    %53 = vector.broadcast %52 : vector<1x256xf32> to vector<8x256xf32>
    %54 = arith.mulf %53, %48 : vector<8x256xf32>
    %55 = vector.broadcast %50 : vector<8x1xf32> to vector<8x256xf32>
    %56 = arith.mulf %55, %54 : vector<8x256xf32>
    %57 = arith.addf %37, %56 : vector<8x256xf32>
    %c241_i32 = arith.constant 241 : i32
    %58 = tpu.dynamic_rotate %2 by %c241_i32 dim 1 : vector<8x256xf32>, i32 -> vector<8x256xf32>
    %c6 = arith.constant 6 : index
    %c0_30 = arith.constant 0 : index
    %c0_31 = arith.constant 0 : index
    %59 = vector.load %arg3[%c6, %c0_30, %c0_31] : memref<9x8x1xf32, #tpu.memory_space<vmem>>, vector<1x8x1xf32>
    %60 = vector.shape_cast %59 : vector<1x8x1xf32> to vector<8x1xf32>
    %c6_32 = arith.constant 6 : index
    %c0_33 = arith.constant 0 : index
    %c0_34 = arith.constant 0 : index
    %61 = vector.load %arg2[%c6_32, %c0_33, %c0_34] : memref<9x1x256xf32, #tpu.memory_space<vmem>>, vector<1x1x256xf32>
    %62 = vector.shape_cast %61 : vector<1x1x256xf32> to vector<1x256xf32>
    %63 = vector.broadcast %62 : vector<1x256xf32> to vector<8x256xf32>
    %64 = arith.mulf %63, %58 : vector<8x256xf32>
    %65 = vector.broadcast %60 : vector<8x1xf32> to vector<8x256xf32>
    %66 = arith.mulf %65, %64 : vector<8x256xf32>
    %67 = arith.addf %47, %66 : vector<8x256xf32>
    %c240_i32 = arith.constant 240 : i32
    %68 = tpu.dynamic_rotate %2 by %c240_i32 dim 1 : vector<8x256xf32>, i32 -> vector<8x256xf32>
    %c7 = arith.constant 7 : index
    %c0_35 = arith.constant 0 : index
    %c0_36 = arith.constant 0 : index
    %69 = vector.load %arg3[%c7, %c0_35, %c0_36] : memref<9x8x1xf32, #tpu.memory_space<vmem>>, vector<1x8x1xf32>
    %70 = vector.shape_cast %69 : vector<1x8x1xf32> to vector<8x1xf32>
    %c7_37 = arith.constant 7 : index
    %c0_38 = arith.constant 0 : index
    %c0_39 = arith.constant 0 : index
    %71 = vector.load %arg2[%c7_37, %c0_38, %c0_39] : memref<9x1x256xf32, #tpu.memory_space<vmem>>, vector<1x1x256xf32>
    %72 = vector.shape_cast %71 : vector<1x1x256xf32> to vector<1x256xf32>
    %73 = vector.broadcast %72 : vector<1x256xf32> to vector<8x256xf32>
    %74 = arith.mulf %73, %68 : vector<8x256xf32>
    %75 = vector.broadcast %70 : vector<8x1xf32> to vector<8x256xf32>
    %76 = arith.mulf %75, %74 : vector<8x256xf32>
    %77 = arith.addf %57, %76 : vector<8x256xf32>
    %c239_i32 = arith.constant 239 : i32
    %78 = tpu.dynamic_rotate %2 by %c239_i32 dim 1 : vector<8x256xf32>, i32 -> vector<8x256xf32>
    %c8 = arith.constant 8 : index
    %c0_40 = arith.constant 0 : index
    %c0_41 = arith.constant 0 : index
    %79 = vector.load %arg3[%c8, %c0_40, %c0_41] : memref<9x8x1xf32, #tpu.memory_space<vmem>>, vector<1x8x1xf32>
    %80 = vector.shape_cast %79 : vector<1x8x1xf32> to vector<8x1xf32>
    %c8_42 = arith.constant 8 : index
    %c0_43 = arith.constant 0 : index
    %c0_44 = arith.constant 0 : index
    %81 = vector.load %arg2[%c8_42, %c0_43, %c0_44] : memref<9x1x256xf32, #tpu.memory_space<vmem>>, vector<1x1x256xf32>
    %82 = vector.shape_cast %81 : vector<1x1x256xf32> to vector<1x256xf32>
    %83 = vector.broadcast %82 : vector<1x256xf32> to vector<8x256xf32>
    %84 = arith.mulf %83, %78 : vector<8x256xf32>
    %85 = vector.broadcast %80 : vector<8x1xf32> to vector<8x256xf32>
    %86 = arith.mulf %85, %84 : vector<8x256xf32>
    %87 = arith.addf %67, %86 : vector<8x256xf32>
    %88 = arith.addf %77, %87 : vector<8x256xf32>
    %c0_45 = arith.constant 0 : index
    %c0_46 = arith.constant 0 : index
    %89 = vector.load %arg4[%c0_45, %c0_46] : memref<16x8xf32, #tpu.memory_space<vmem>>, vector<16x8xf32>
    %cst_47 = arith.constant dense<0.000000e+00> : vector<16x256xf32>
    %90 = tpu.matmul %89, %88, %cst_47 {dimension_numbers = #tpu.dot_dimension_numbers<[1], [0], [0], [1], [0, 0, 1, 1], [], []>} : vector<16x8xf32>, vector<8x256xf32>, vector<16x256xf32> -> vector<16x256xf32>
    %c0_48 = arith.constant 0 : index
    %c0_49 = arith.constant 0 : index
    %91 = vector.load %arg5[%c0_48, %c0_49] : memref<16x1xf32, #tpu.memory_space<vmem>>, vector<16x1xf32>
    %92 = vector.broadcast %91 : vector<16x1xf32> to vector<16x256xf32>
    %93 = arith.addf %90, %92 : vector<16x256xf32>
    %cst_50 = arith.constant 0.000000e+00 : f32
    %94 = vector.broadcast %cst_50 : f32 to vector<16x256xf32>
    %95 = arith.maximumf %93, %94 : vector<16x256xf32>
    %c4_51 = arith.constant 4 : index
    %c0_52 = arith.constant 0 : index
    %c0_53 = arith.constant 0 : index
    %96 = vector.load %arg6[%c4_51, %c0_52, %c0_53] : memref<9x16x1xf32, #tpu.memory_space<vmem>>, vector<1x16x1xf32>
    %97 = vector.shape_cast %96 : vector<1x16x1xf32> to vector<16x1xf32>
    %98 = vector.broadcast %97 : vector<16x1xf32> to vector<16x256xf32>
    %99 = arith.mulf %98, %95 : vector<16x256xf32>
    %cst_54 = arith.constant 0.000000e+00 : f32
    %100 = vector.broadcast %cst_54 : f32 to vector<16x256xf32>
    %c17_i32_55 = arith.constant 17 : i32
    %101 = tpu.dynamic_rotate %95 by %c17_i32_55 dim 1 : vector<16x256xf32>, i32 -> vector<16x256xf32>
    %c0_56 = arith.constant 0 : index
    %c0_57 = arith.constant 0 : index
    %c0_58 = arith.constant 0 : index
    %102 = vector.load %arg6[%c0_56, %c0_57, %c0_58] : memref<9x16x1xf32, #tpu.memory_space<vmem>>, vector<1x16x1xf32>
    %103 = vector.shape_cast %102 : vector<1x16x1xf32> to vector<16x1xf32>
    %c0_59 = arith.constant 0 : index
    %c0_60 = arith.constant 0 : index
    %c0_61 = arith.constant 0 : index
    %104 = vector.load %arg2[%c0_59, %c0_60, %c0_61] : memref<9x1x256xf32, #tpu.memory_space<vmem>>, vector<1x1x256xf32>
    %105 = vector.shape_cast %104 : vector<1x1x256xf32> to vector<1x256xf32>
    %106 = vector.broadcast %105 : vector<1x256xf32> to vector<16x256xf32>
    %107 = arith.mulf %106, %101 : vector<16x256xf32>
    %108 = vector.broadcast %103 : vector<16x1xf32> to vector<16x256xf32>
    %109 = arith.mulf %108, %107 : vector<16x256xf32>
    %110 = arith.addf %99, %109 : vector<16x256xf32>
    %c16_i32_62 = arith.constant 16 : i32
    %111 = tpu.dynamic_rotate %95 by %c16_i32_62 dim 1 : vector<16x256xf32>, i32 -> vector<16x256xf32>
    %c1_63 = arith.constant 1 : index
    %c0_64 = arith.constant 0 : index
    %c0_65 = arith.constant 0 : index
    %112 = vector.load %arg6[%c1_63, %c0_64, %c0_65] : memref<9x16x1xf32, #tpu.memory_space<vmem>>, vector<1x16x1xf32>
    %113 = vector.shape_cast %112 : vector<1x16x1xf32> to vector<16x1xf32>
    %c1_66 = arith.constant 1 : index
    %c0_67 = arith.constant 0 : index
    %c0_68 = arith.constant 0 : index
    %114 = vector.load %arg2[%c1_66, %c0_67, %c0_68] : memref<9x1x256xf32, #tpu.memory_space<vmem>>, vector<1x1x256xf32>
    %115 = vector.shape_cast %114 : vector<1x1x256xf32> to vector<1x256xf32>
    %116 = vector.broadcast %115 : vector<1x256xf32> to vector<16x256xf32>
    %117 = arith.mulf %116, %111 : vector<16x256xf32>
    %118 = vector.broadcast %113 : vector<16x1xf32> to vector<16x256xf32>
    %119 = arith.mulf %118, %117 : vector<16x256xf32>
    %120 = arith.addf %100, %119 : vector<16x256xf32>
    %c15_i32_69 = arith.constant 15 : i32
    %121 = tpu.dynamic_rotate %95 by %c15_i32_69 dim 1 : vector<16x256xf32>, i32 -> vector<16x256xf32>
    %c2_70 = arith.constant 2 : index
    %c0_71 = arith.constant 0 : index
    %c0_72 = arith.constant 0 : index
    %122 = vector.load %arg6[%c2_70, %c0_71, %c0_72] : memref<9x16x1xf32, #tpu.memory_space<vmem>>, vector<1x16x1xf32>
    %123 = vector.shape_cast %122 : vector<1x16x1xf32> to vector<16x1xf32>
    %c2_73 = arith.constant 2 : index
    %c0_74 = arith.constant 0 : index
    %c0_75 = arith.constant 0 : index
    %124 = vector.load %arg2[%c2_73, %c0_74, %c0_75] : memref<9x1x256xf32, #tpu.memory_space<vmem>>, vector<1x1x256xf32>
    %125 = vector.shape_cast %124 : vector<1x1x256xf32> to vector<1x256xf32>
    %126 = vector.broadcast %125 : vector<1x256xf32> to vector<16x256xf32>
    %127 = arith.mulf %126, %121 : vector<16x256xf32>
    %128 = vector.broadcast %123 : vector<16x1xf32> to vector<16x256xf32>
    %129 = arith.mulf %128, %127 : vector<16x256xf32>
    %130 = arith.addf %110, %129 : vector<16x256xf32>
    %c1_i32_76 = arith.constant 1 : i32
    %131 = tpu.dynamic_rotate %95 by %c1_i32_76 dim 1 : vector<16x256xf32>, i32 -> vector<16x256xf32>
    %c3_77 = arith.constant 3 : index
    %c0_78 = arith.constant 0 : index
    %c0_79 = arith.constant 0 : index
    %132 = vector.load %arg6[%c3_77, %c0_78, %c0_79] : memref<9x16x1xf32, #tpu.memory_space<vmem>>, vector<1x16x1xf32>
    %133 = vector.shape_cast %132 : vector<1x16x1xf32> to vector<16x1xf32>
    %c3_80 = arith.constant 3 : index
    %c0_81 = arith.constant 0 : index
    %c0_82 = arith.constant 0 : index
    %134 = vector.load %arg2[%c3_80, %c0_81, %c0_82] : memref<9x1x256xf32, #tpu.memory_space<vmem>>, vector<1x1x256xf32>
    %135 = vector.shape_cast %134 : vector<1x1x256xf32> to vector<1x256xf32>
    %136 = vector.broadcast %135 : vector<1x256xf32> to vector<16x256xf32>
    %137 = arith.mulf %136, %131 : vector<16x256xf32>
    %138 = vector.broadcast %133 : vector<16x1xf32> to vector<16x256xf32>
    %139 = arith.mulf %138, %137 : vector<16x256xf32>
    %140 = arith.addf %120, %139 : vector<16x256xf32>
    %c255_i32_83 = arith.constant 255 : i32
    %141 = tpu.dynamic_rotate %95 by %c255_i32_83 dim 1 : vector<16x256xf32>, i32 -> vector<16x256xf32>
    %c5_84 = arith.constant 5 : index
    %c0_85 = arith.constant 0 : index
    %c0_86 = arith.constant 0 : index
    %142 = vector.load %arg6[%c5_84, %c0_85, %c0_86] : memref<9x16x1xf32, #tpu.memory_space<vmem>>, vector<1x16x1xf32>
    %143 = vector.shape_cast %142 : vector<1x16x1xf32> to vector<16x1xf32>
    %c5_87 = arith.constant 5 : index
    %c0_88 = arith.constant 0 : index
    %c0_89 = arith.constant 0 : index
    %144 = vector.load %arg2[%c5_87, %c0_88, %c0_89] : memref<9x1x256xf32, #tpu.memory_space<vmem>>, vector<1x1x256xf32>
    %145 = vector.shape_cast %144 : vector<1x1x256xf32> to vector<1x256xf32>
    %146 = vector.broadcast %145 : vector<1x256xf32> to vector<16x256xf32>
    %147 = arith.mulf %146, %141 : vector<16x256xf32>
    %148 = vector.broadcast %143 : vector<16x1xf32> to vector<16x256xf32>
    %149 = arith.mulf %148, %147 : vector<16x256xf32>
    %150 = arith.addf %130, %149 : vector<16x256xf32>
    %c241_i32_90 = arith.constant 241 : i32
    %151 = tpu.dynamic_rotate %95 by %c241_i32_90 dim 1 : vector<16x256xf32>, i32 -> vector<16x256xf32>
    %c6_91 = arith.constant 6 : index
    %c0_92 = arith.constant 0 : index
    %c0_93 = arith.constant 0 : index
    %152 = vector.load %arg6[%c6_91, %c0_92, %c0_93] : memref<9x16x1xf32, #tpu.memory_space<vmem>>, vector<1x16x1xf32>
    %153 = vector.shape_cast %152 : vector<1x16x1xf32> to vector<16x1xf32>
    %c6_94 = arith.constant 6 : index
    %c0_95 = arith.constant 0 : index
    %c0_96 = arith.constant 0 : index
    %154 = vector.load %arg2[%c6_94, %c0_95, %c0_96] : memref<9x1x256xf32, #tpu.memory_space<vmem>>, vector<1x1x256xf32>
    %155 = vector.shape_cast %154 : vector<1x1x256xf32> to vector<1x256xf32>
    %156 = vector.broadcast %155 : vector<1x256xf32> to vector<16x256xf32>
    %157 = arith.mulf %156, %151 : vector<16x256xf32>
    %158 = vector.broadcast %153 : vector<16x1xf32> to vector<16x256xf32>
    %159 = arith.mulf %158, %157 : vector<16x256xf32>
    %160 = arith.addf %140, %159 : vector<16x256xf32>
    %c240_i32_97 = arith.constant 240 : i32
    %161 = tpu.dynamic_rotate %95 by %c240_i32_97 dim 1 : vector<16x256xf32>, i32 -> vector<16x256xf32>
    %c7_98 = arith.constant 7 : index
    %c0_99 = arith.constant 0 : index
    %c0_100 = arith.constant 0 : index
    %162 = vector.load %arg6[%c7_98, %c0_99, %c0_100] : memref<9x16x1xf32, #tpu.memory_space<vmem>>, vector<1x16x1xf32>
    %163 = vector.shape_cast %162 : vector<1x16x1xf32> to vector<16x1xf32>
    %c7_101 = arith.constant 7 : index
    %c0_102 = arith.constant 0 : index
    %c0_103 = arith.constant 0 : index
    %164 = vector.load %arg2[%c7_101, %c0_102, %c0_103] : memref<9x1x256xf32, #tpu.memory_space<vmem>>, vector<1x1x256xf32>
    %165 = vector.shape_cast %164 : vector<1x1x256xf32> to vector<1x256xf32>
    %166 = vector.broadcast %165 : vector<1x256xf32> to vector<16x256xf32>
    %167 = arith.mulf %166, %161 : vector<16x256xf32>
    %168 = vector.broadcast %163 : vector<16x1xf32> to vector<16x256xf32>
    %169 = arith.mulf %168, %167 : vector<16x256xf32>
    %170 = arith.addf %150, %169 : vector<16x256xf32>
    %c239_i32_104 = arith.constant 239 : i32
    %171 = tpu.dynamic_rotate %95 by %c239_i32_104 dim 1 : vector<16x256xf32>, i32 -> vector<16x256xf32>
    %c8_105 = arith.constant 8 : index
    %c0_106 = arith.constant 0 : index
    %c0_107 = arith.constant 0 : index
    %172 = vector.load %arg6[%c8_105, %c0_106, %c0_107] : memref<9x16x1xf32, #tpu.memory_space<vmem>>, vector<1x16x1xf32>
    %173 = vector.shape_cast %172 : vector<1x16x1xf32> to vector<16x1xf32>
    %c8_108 = arith.constant 8 : index
    %c0_109 = arith.constant 0 : index
    %c0_110 = arith.constant 0 : index
    %174 = vector.load %arg2[%c8_108, %c0_109, %c0_110] : memref<9x1x256xf32, #tpu.memory_space<vmem>>, vector<1x1x256xf32>
    %175 = vector.shape_cast %174 : vector<1x1x256xf32> to vector<1x256xf32>
    %176 = vector.broadcast %175 : vector<1x256xf32> to vector<16x256xf32>
    %177 = arith.mulf %176, %171 : vector<16x256xf32>
    %178 = vector.broadcast %173 : vector<16x1xf32> to vector<16x256xf32>
    %179 = arith.mulf %178, %177 : vector<16x256xf32>
    %180 = arith.addf %160, %179 : vector<16x256xf32>
    %181 = arith.addf %170, %180 : vector<16x256xf32>
    %c0_111 = arith.constant 0 : index
    %c0_112 = arith.constant 0 : index
    %182 = vector.load %arg7[%c0_111, %c0_112] : memref<16x16xf32, #tpu.memory_space<vmem>>, vector<16x16xf32>
    %cst_113 = arith.constant dense<0.000000e+00> : vector<16x256xf32>
    %183 = tpu.matmul %182, %181, %cst_113 {dimension_numbers = #tpu.dot_dimension_numbers<[1], [0], [0], [1], [0, 0, 1, 1], [], []>} : vector<16x16xf32>, vector<16x256xf32>, vector<16x256xf32> -> vector<16x256xf32>
    %c0_114 = arith.constant 0 : index
    %c0_115 = arith.constant 0 : index
    %184 = vector.load %arg8[%c0_114, %c0_115] : memref<16x1xf32, #tpu.memory_space<vmem>>, vector<16x1xf32>
    %185 = vector.broadcast %184 : vector<16x1xf32> to vector<16x256xf32>
    %186 = arith.addf %183, %185 : vector<16x256xf32>
    %cst_116 = arith.constant 0.000000e+00 : f32
    %187 = vector.broadcast %cst_116 : f32 to vector<16x256xf32>
    %188 = arith.maximumf %186, %187 : vector<16x256xf32>
    %c4_117 = arith.constant 4 : index
    %c0_118 = arith.constant 0 : index
    %c0_119 = arith.constant 0 : index
    %189 = vector.load %arg9[%c4_117, %c0_118, %c0_119] : memref<9x16x1xf32, #tpu.memory_space<vmem>>, vector<1x16x1xf32>
    %190 = vector.shape_cast %189 : vector<1x16x1xf32> to vector<16x1xf32>
    %191 = vector.broadcast %190 : vector<16x1xf32> to vector<16x256xf32>
    %192 = arith.mulf %191, %188 : vector<16x256xf32>
    %cst_120 = arith.constant 0.000000e+00 : f32
    %193 = vector.broadcast %cst_120 : f32 to vector<16x256xf32>
    %c17_i32_121 = arith.constant 17 : i32
    %194 = tpu.dynamic_rotate %188 by %c17_i32_121 dim 1 : vector<16x256xf32>, i32 -> vector<16x256xf32>
    %c0_122 = arith.constant 0 : index
    %c0_123 = arith.constant 0 : index
    %c0_124 = arith.constant 0 : index
    %195 = vector.load %arg9[%c0_122, %c0_123, %c0_124] : memref<9x16x1xf32, #tpu.memory_space<vmem>>, vector<1x16x1xf32>
    %196 = vector.shape_cast %195 : vector<1x16x1xf32> to vector<16x1xf32>
    %c0_125 = arith.constant 0 : index
    %c0_126 = arith.constant 0 : index
    %c0_127 = arith.constant 0 : index
    %197 = vector.load %arg2[%c0_125, %c0_126, %c0_127] : memref<9x1x256xf32, #tpu.memory_space<vmem>>, vector<1x1x256xf32>
    %198 = vector.shape_cast %197 : vector<1x1x256xf32> to vector<1x256xf32>
    %199 = vector.broadcast %198 : vector<1x256xf32> to vector<16x256xf32>
    %200 = arith.mulf %199, %194 : vector<16x256xf32>
    %201 = vector.broadcast %196 : vector<16x1xf32> to vector<16x256xf32>
    %202 = arith.mulf %201, %200 : vector<16x256xf32>
    %203 = arith.addf %192, %202 : vector<16x256xf32>
    %c16_i32_128 = arith.constant 16 : i32
    %204 = tpu.dynamic_rotate %188 by %c16_i32_128 dim 1 : vector<16x256xf32>, i32 -> vector<16x256xf32>
    %c1_129 = arith.constant 1 : index
    %c0_130 = arith.constant 0 : index
    %c0_131 = arith.constant 0 : index
    %205 = vector.load %arg9[%c1_129, %c0_130, %c0_131] : memref<9x16x1xf32, #tpu.memory_space<vmem>>, vector<1x16x1xf32>
    %206 = vector.shape_cast %205 : vector<1x16x1xf32> to vector<16x1xf32>
    %c1_132 = arith.constant 1 : index
    %c0_133 = arith.constant 0 : index
    %c0_134 = arith.constant 0 : index
    %207 = vector.load %arg2[%c1_132, %c0_133, %c0_134] : memref<9x1x256xf32, #tpu.memory_space<vmem>>, vector<1x1x256xf32>
    %208 = vector.shape_cast %207 : vector<1x1x256xf32> to vector<1x256xf32>
    %209 = vector.broadcast %208 : vector<1x256xf32> to vector<16x256xf32>
    %210 = arith.mulf %209, %204 : vector<16x256xf32>
    %211 = vector.broadcast %206 : vector<16x1xf32> to vector<16x256xf32>
    %212 = arith.mulf %211, %210 : vector<16x256xf32>
    %213 = arith.addf %193, %212 : vector<16x256xf32>
    %c15_i32_135 = arith.constant 15 : i32
    %214 = tpu.dynamic_rotate %188 by %c15_i32_135 dim 1 : vector<16x256xf32>, i32 -> vector<16x256xf32>
    %c2_136 = arith.constant 2 : index
    %c0_137 = arith.constant 0 : index
    %c0_138 = arith.constant 0 : index
    %215 = vector.load %arg9[%c2_136, %c0_137, %c0_138] : memref<9x16x1xf32, #tpu.memory_space<vmem>>, vector<1x16x1xf32>
    %216 = vector.shape_cast %215 : vector<1x16x1xf32> to vector<16x1xf32>
    %c2_139 = arith.constant 2 : index
    %c0_140 = arith.constant 0 : index
    %c0_141 = arith.constant 0 : index
    %217 = vector.load %arg2[%c2_139, %c0_140, %c0_141] : memref<9x1x256xf32, #tpu.memory_space<vmem>>, vector<1x1x256xf32>
    %218 = vector.shape_cast %217 : vector<1x1x256xf32> to vector<1x256xf32>
    %219 = vector.broadcast %218 : vector<1x256xf32> to vector<16x256xf32>
    %220 = arith.mulf %219, %214 : vector<16x256xf32>
    %221 = vector.broadcast %216 : vector<16x1xf32> to vector<16x256xf32>
    %222 = arith.mulf %221, %220 : vector<16x256xf32>
    %223 = arith.addf %203, %222 : vector<16x256xf32>
    %c1_i32_142 = arith.constant 1 : i32
    %224 = tpu.dynamic_rotate %188 by %c1_i32_142 dim 1 : vector<16x256xf32>, i32 -> vector<16x256xf32>
    %c3_143 = arith.constant 3 : index
    %c0_144 = arith.constant 0 : index
    %c0_145 = arith.constant 0 : index
    %225 = vector.load %arg9[%c3_143, %c0_144, %c0_145] : memref<9x16x1xf32, #tpu.memory_space<vmem>>, vector<1x16x1xf32>
    %226 = vector.shape_cast %225 : vector<1x16x1xf32> to vector<16x1xf32>
    %c3_146 = arith.constant 3 : index
    %c0_147 = arith.constant 0 : index
    %c0_148 = arith.constant 0 : index
    %227 = vector.load %arg2[%c3_146, %c0_147, %c0_148] : memref<9x1x256xf32, #tpu.memory_space<vmem>>, vector<1x1x256xf32>
    %228 = vector.shape_cast %227 : vector<1x1x256xf32> to vector<1x256xf32>
    %229 = vector.broadcast %228 : vector<1x256xf32> to vector<16x256xf32>
    %230 = arith.mulf %229, %224 : vector<16x256xf32>
    %231 = vector.broadcast %226 : vector<16x1xf32> to vector<16x256xf32>
    %232 = arith.mulf %231, %230 : vector<16x256xf32>
    %233 = arith.addf %213, %232 : vector<16x256xf32>
    %c255_i32_149 = arith.constant 255 : i32
    %234 = tpu.dynamic_rotate %188 by %c255_i32_149 dim 1 : vector<16x256xf32>, i32 -> vector<16x256xf32>
    %c5_150 = arith.constant 5 : index
    %c0_151 = arith.constant 0 : index
    %c0_152 = arith.constant 0 : index
    %235 = vector.load %arg9[%c5_150, %c0_151, %c0_152] : memref<9x16x1xf32, #tpu.memory_space<vmem>>, vector<1x16x1xf32>
    %236 = vector.shape_cast %235 : vector<1x16x1xf32> to vector<16x1xf32>
    %c5_153 = arith.constant 5 : index
    %c0_154 = arith.constant 0 : index
    %c0_155 = arith.constant 0 : index
    %237 = vector.load %arg2[%c5_153, %c0_154, %c0_155] : memref<9x1x256xf32, #tpu.memory_space<vmem>>, vector<1x1x256xf32>
    %238 = vector.shape_cast %237 : vector<1x1x256xf32> to vector<1x256xf32>
    %239 = vector.broadcast %238 : vector<1x256xf32> to vector<16x256xf32>
    %240 = arith.mulf %239, %234 : vector<16x256xf32>
    %241 = vector.broadcast %236 : vector<16x1xf32> to vector<16x256xf32>
    %242 = arith.mulf %241, %240 : vector<16x256xf32>
    %243 = arith.addf %223, %242 : vector<16x256xf32>
    %c241_i32_156 = arith.constant 241 : i32
    %244 = tpu.dynamic_rotate %188 by %c241_i32_156 dim 1 : vector<16x256xf32>, i32 -> vector<16x256xf32>
    %c6_157 = arith.constant 6 : index
    %c0_158 = arith.constant 0 : index
    %c0_159 = arith.constant 0 : index
    %245 = vector.load %arg9[%c6_157, %c0_158, %c0_159] : memref<9x16x1xf32, #tpu.memory_space<vmem>>, vector<1x16x1xf32>
    %246 = vector.shape_cast %245 : vector<1x16x1xf32> to vector<16x1xf32>
    %c6_160 = arith.constant 6 : index
    %c0_161 = arith.constant 0 : index
    %c0_162 = arith.constant 0 : index
    %247 = vector.load %arg2[%c6_160, %c0_161, %c0_162] : memref<9x1x256xf32, #tpu.memory_space<vmem>>, vector<1x1x256xf32>
    %248 = vector.shape_cast %247 : vector<1x1x256xf32> to vector<1x256xf32>
    %249 = vector.broadcast %248 : vector<1x256xf32> to vector<16x256xf32>
    %250 = arith.mulf %249, %244 : vector<16x256xf32>
    %251 = vector.broadcast %246 : vector<16x1xf32> to vector<16x256xf32>
    %252 = arith.mulf %251, %250 : vector<16x256xf32>
    %253 = arith.addf %233, %252 : vector<16x256xf32>
    %c240_i32_163 = arith.constant 240 : i32
    %254 = tpu.dynamic_rotate %188 by %c240_i32_163 dim 1 : vector<16x256xf32>, i32 -> vector<16x256xf32>
    %c7_164 = arith.constant 7 : index
    %c0_165 = arith.constant 0 : index
    %c0_166 = arith.constant 0 : index
    %255 = vector.load %arg9[%c7_164, %c0_165, %c0_166] : memref<9x16x1xf32, #tpu.memory_space<vmem>>, vector<1x16x1xf32>
    %256 = vector.shape_cast %255 : vector<1x16x1xf32> to vector<16x1xf32>
    %c7_167 = arith.constant 7 : index
    %c0_168 = arith.constant 0 : index
    %c0_169 = arith.constant 0 : index
    %257 = vector.load %arg2[%c7_167, %c0_168, %c0_169] : memref<9x1x256xf32, #tpu.memory_space<vmem>>, vector<1x1x256xf32>
    %258 = vector.shape_cast %257 : vector<1x1x256xf32> to vector<1x256xf32>
    %259 = vector.broadcast %258 : vector<1x256xf32> to vector<16x256xf32>
    %260 = arith.mulf %259, %254 : vector<16x256xf32>
    %261 = vector.broadcast %256 : vector<16x1xf32> to vector<16x256xf32>
    %262 = arith.mulf %261, %260 : vector<16x256xf32>
    %263 = arith.addf %243, %262 : vector<16x256xf32>
    %c239_i32_170 = arith.constant 239 : i32
    %264 = tpu.dynamic_rotate %188 by %c239_i32_170 dim 1 : vector<16x256xf32>, i32 -> vector<16x256xf32>
    %c8_171 = arith.constant 8 : index
    %c0_172 = arith.constant 0 : index
    %c0_173 = arith.constant 0 : index
    %265 = vector.load %arg9[%c8_171, %c0_172, %c0_173] : memref<9x16x1xf32, #tpu.memory_space<vmem>>, vector<1x16x1xf32>
    %266 = vector.shape_cast %265 : vector<1x16x1xf32> to vector<16x1xf32>
    %c8_174 = arith.constant 8 : index
    %c0_175 = arith.constant 0 : index
    %c0_176 = arith.constant 0 : index
    %267 = vector.load %arg2[%c8_174, %c0_175, %c0_176] : memref<9x1x256xf32, #tpu.memory_space<vmem>>, vector<1x1x256xf32>
    %268 = vector.shape_cast %267 : vector<1x1x256xf32> to vector<1x256xf32>
    %269 = vector.broadcast %268 : vector<1x256xf32> to vector<16x256xf32>
    %270 = arith.mulf %269, %264 : vector<16x256xf32>
    %271 = vector.broadcast %266 : vector<16x1xf32> to vector<16x256xf32>
    %272 = arith.mulf %271, %270 : vector<16x256xf32>
    %273 = arith.addf %253, %272 : vector<16x256xf32>
    %274 = arith.addf %263, %273 : vector<16x256xf32>
    %c0_177 = arith.constant 0 : index
    %c0_178 = arith.constant 0 : index
    %275 = vector.load %arg10[%c0_177, %c0_178] : memref<16x16xf32, #tpu.memory_space<vmem>>, vector<16x16xf32>
    %cst_179 = arith.constant dense<0.000000e+00> : vector<16x256xf32>
    %276 = tpu.matmul %275, %274, %cst_179 {dimension_numbers = #tpu.dot_dimension_numbers<[1], [0], [0], [1], [0, 0, 1, 1], [], []>} : vector<16x16xf32>, vector<16x256xf32>, vector<16x256xf32> -> vector<16x256xf32>
    %c0_180 = arith.constant 0 : index
    %c0_181 = arith.constant 0 : index
    %277 = vector.load %arg11[%c0_180, %c0_181] : memref<16x1xf32, #tpu.memory_space<vmem>>, vector<16x1xf32>
    %278 = vector.broadcast %277 : vector<16x1xf32> to vector<16x256xf32>
    %279 = arith.addf %276, %278 : vector<16x256xf32>
    %c0_182 = arith.constant 0 : index
    %c0_183 = arith.constant 0 : index
    %280 = vector.load %arg12[%c0_182, %c0_183] : memref<16x8xf32, #tpu.memory_space<vmem>>, vector<16x8xf32>
    %cst_184 = arith.constant dense<0.000000e+00> : vector<16x256xf32>
    %281 = tpu.matmul %280, %0, %cst_184 {dimension_numbers = #tpu.dot_dimension_numbers<[1], [0], [0], [1], [0, 0, 1, 1], [], []>} : vector<16x8xf32>, vector<8x256xf32>, vector<16x256xf32> -> vector<16x256xf32>
    %c0_185 = arith.constant 0 : index
    %c0_186 = arith.constant 0 : index
    %282 = vector.load %arg13[%c0_185, %c0_186] : memref<16x1xf32, #tpu.memory_space<vmem>>, vector<16x1xf32>
    %283 = vector.broadcast %282 : vector<16x1xf32> to vector<16x256xf32>
    %284 = arith.addf %281, %283 : vector<16x256xf32>
    %285 = arith.addf %279, %284 : vector<16x256xf32>
    %c0_187 = arith.constant 0 : index
    %c0_188 = arith.constant 0 : index
    %286 = vector.load %arg14[%c0_187, %c0_188] : memref<16x256xf32, #tpu.memory_space<vmem>>, vector<16x256xf32>
    tpu.vector_store %arg14[%c0_187, %c0_188], %285 {strides = array<i32>} : memref<16x256xf32, #tpu.memory_space<vmem>>, vector<16x256xf32>,
    return
  }
  func.func @transform_0(%arg0: i32) -> (i32, i32) {
    %c0_i32 = arith.constant 0 : i32
    %c0_i32_0 = arith.constant 0 : i32
    return %c0_i32, %arg0 : i32, i32
  }
  func.func @transform_1(%arg0: i32) -> (i32, i32, i32) {
    %c0_i32 = arith.constant 0 : i32
    %c0_i32_0 = arith.constant 0 : i32
    %c0_i32_1 = arith.constant 0 : i32
    %c0_i32_2 = arith.constant 0 : i32
    return %c0_i32, %c0_i32_0, %c0_i32_1 : i32, i32, i32
  }
  func.func @transform_2(%arg0: i32) -> (i32, i32, i32) {
    %c0_i32 = arith.constant 0 : i32
    %c0_i32_0 = arith.constant 0 : i32
    %c0_i32_1 = arith.constant 0 : i32
    %c0_i32_2 = arith.constant 0 : i32
    return %c0_i32, %c0_i32_0, %c0_i32_1 : i32, i32, i32
  }
  func.func @transform_3(%arg0: i32) -> (i32, i32) {
    %c0_i32 = arith.constant 0 : i32
    %c0_i32_0 = arith.constant 0 : i32
    %c0_i32_1 = arith.constant 0 : i32
    return %c0_i32, %c0_i32_0 : i32, i32
  }
  func.func @transform_4(%arg0: i32) -> (i32, i32) {
    %c0_i32 = arith.constant 0 : i32
    %c0_i32_0 = arith.constant 0 : i32
    %c0_i32_1 = arith.constant 0 : i32
    return %c0_i32, %c0_i32_0 : i32, i32
  }
  func.func @transform_5(%arg0: i32) -> (i32, i32, i32) {
    %c0_i32 = arith.constant 0 : i32
    %c0_i32_0 = arith.constant 0 : i32
    %c0_i32_1 = arith.constant 0 : i32
    %c0_i32_2 = arith.constant 0 : i32
    return %c0_i32, %c0_i32_0, %c0_i32_1 : i32, i32, i32
  }
  func.func @transform_6(%arg0: i32) -> (i32, i32) {
    %c0_i32 = arith.constant 0 : i32
    %c0_i32_0 = arith.constant 0 : i32
    %c0_i32_1 = arith.constant 0 : i32
    return %c0_i32, %c0_i32_0 : i32, i32
  }
  func.func @transform_7(%arg0: i32) -> (i32, i32) {
    %c0_i32 = arith.constant 0 : i32
    %c0_i32_0 = arith.constant 0 : i32
    %c0_i32_1 = arith.constant 0 : i32
    return %c0_i32, %c0_i32_0 : i32, i32
  }
  func.func @transform_8(%arg0: i32) -> (i32, i32, i32) {
    %c0_i32 = arith.constant 0 : i32
    %c0_i32_0 = arith.constant 0 : i32
    %c0_i32_1 = arith.constant 0 : i32
    %c0_i32_2 = arith.constant 0 : i32
    return %c0_i32, %c0_i32_0, %c0_i32_1 : i32, i32, i32
  }
  func.func @transform_9(%arg0: i32) -> (i32, i32) {
    %c0_i32 = arith.constant 0 : i32
    %c0_i32_0 = arith.constant 0 : i32
    %c0_i32_1 = arith.constant 0 : i32
    return %c0_i32, %c0_i32_0 : i32, i32
  }
  func.func @transform_10(%arg0: i32) -> (i32, i32) {
    %c0_i32 = arith.constant 0 : i32
    %c0_i32_0 = arith.constant 0 : i32
    %c0_i32_1 = arith.constant 0 : i32
    return %c0_i32, %c0_i32_0 : i32, i32
  }
  func.func @transform_11(%arg0: i32) -> (i32, i32) {
    %c0_i32 = arith.constant 0 : i32
    %c0_i32_0 = arith.constant 0 : i32
    %c0_i32_1 = arith.constant 0 : i32
    return %c0_i32, %c0_i32_0 : i32, i32
  }
  func.func @transform_12(%arg0: i32) -> (i32, i32) {
    %c0_i32 = arith.constant 0 : i32
    %c0_i32_0 = arith.constant 0 : i32
    %c0_i32_1 = arith.constant 0 : i32
    return %c0_i32, %c0_i32_0 : i32, i32
  }
  func.func @transform_13(%arg0: i32) -> (i32, i32) {
    %c0_i32 = arith.constant 0 : i32
    %c0_i32_0 = arith.constant 0 : i32
    return %c0_i32, %arg0 : i32, i32
  }
}

</mosaic_0001>

<llo_original>
// kernel: tpu_custom_call.1
$region0: #{tpu_custom_call.1}
  #allocation0 [shape = 'u32[]', space=smem, size = 0x4, offset = 0x4, fixed_abs, tag = 'smem constant byte address 0x4 - core index']
  #allocation1 [shape = 'u32[144,128]{1,0:T(1,128)}', space=vmem, size = 0x12000, scoped, tag = 'internal scratch']
  %s0 = inlined_call_operand.vmem [shape: f32[8,512], index: 0, kind: input, shape index: {}]
  %s1 = inlined_call_operand.vmem [shape: f32[9,1,256], index: 1, kind: input, shape index: {}]
  %s2 = inlined_call_operand.vmem [shape: f32[9,8,1], index: 2, kind: input, shape index: {}]
  %s3 = inlined_call_operand.vmem [shape: f32[16,8], index: 3, kind: input, shape index: {}]
  %s4 = inlined_call_operand.vmem [shape: f32[16,1], index: 4, kind: input, shape index: {}]
  %s5 = inlined_call_operand.vmem [shape: f32[9,16,1], index: 5, kind: input, shape index: {}]
  %s6 = inlined_call_operand.vmem [shape: f32[16,16], index: 6, kind: input, shape index: {}]
  %s7 = inlined_call_operand.vmem [shape: f32[16,1], index: 7, kind: input, shape index: {}]
  %s8 = inlined_call_operand.vmem [shape: f32[9,16,1], index: 8, kind: input, shape index: {}]
  %s9 = inlined_call_operand.vmem [shape: f32[16,16], index: 9, kind: input, shape index: {}]
  %s10 = inlined_call_operand.vmem [shape: f32[16,1], index: 10, kind: input, shape index: {}]
  %s11 = inlined_call_operand.vmem [shape: f32[16,8], index: 11, kind: input, shape index: {}]
  %s12 = inlined_call_operand.vmem [shape: f32[16,1], index: 12, kind: input, shape index: {}]
  %s13 = inlined_call_operand.hbm [shape: f32[16,512], index: 13, kind: output, shape index: {}]
  %s14 = sld [smem:[#allocation0]]
  $region85: #{tpu_custom_call.1} parent=0
    _
  %s16 = ssub.s32 1, %s14
  %s17 = scalar_select 0, %s16, %s14
  $region1: #{tpu_custom_call.1} parent=0
    #allocation2 [shape = 'u8[32768]{0}', space=vmem, size = 0x8000, scoped, tag = 'output window, operand 0']
    #allocation3 [shape = 's32[2]{0}', space=sflag, size = 0x8, scoped, tag = 'scoped memory for tpu_custom_call.1']
    %18 = vsyncpa [#allocation3], 0
    %s19 = scalar_lea.sflag [#allocation3], 1
    %20 = vsyncpa %s19, 0
    loop: start=0, step=1, limit=4
    $region2: #{tpu_custom_call.1} parent=1 // loop_pre_header
      _
    $region3: #{tpu_custom_call.1} parent=1 // loop_header
      %s22 = sphi 0, %s26
      %p23 = scmp.ge.s32.totalorder %s22, 4
      %s32 = sphi 0, %s34
      %s35 = sphi 0, %s32
      %s36 = sphi 0, %s35
      %s52 = sphi 0, %s36
      %s56 = sphi 0, %s56
      %s58 = sphi 0, %s56
      %s59 = sphi 0, %s58
      %s73 = sphi 0, %s59
      %s77 = sphi 0, %s77
      %s79 = sphi 0, %s77
      %s80 = sphi 0, %s79
      %s94 = sphi 0, %s80
      %s98 = sphi 0, %s98
      %s100 = sphi 0, %s98
      %s101 = sphi 0, %s100
      %s115 = sphi 0, %s101
      %s119 = sphi 0, %s119
      %s121 = sphi 0, %s119
      %s122 = sphi 0, %s121
      %s136 = sphi 0, %s122
      %s140 = sphi 0, %s140
      %s142 = sphi 0, %s140
      %s143 = sphi 0, %s142
      %s157 = sphi 0, %s143
      %s161 = sphi 0, %s161
      %s163 = sphi 0, %s161
      %s164 = sphi 0, %s163
      %s178 = sphi 0, %s164
      %s182 = sphi 0, %s182
      %s184 = sphi 0, %s182
      %s185 = sphi 0, %s184
      %s199 = sphi 0, %s185
      %s203 = sphi 0, %s203
      %s205 = sphi 0, %s203
      %s206 = sphi 0, %s205
      %s220 = sphi 0, %s206
      %s224 = sphi 0, %s224
      %s226 = sphi 0, %s224
      %s227 = sphi 0, %s226
      %s241 = sphi 0, %s227
      %s245 = sphi 0, %s245
      %s247 = sphi 0, %s245
      %s248 = sphi 0, %s247
      %s262 = sphi 0, %s248
      %s266 = sphi 0, %s266
      %s268 = sphi 0, %s266
      %s269 = sphi 0, %s268
      %s283 = sphi 0, %s269
      %s287 = sphi 0, %s287
      %s289 = sphi 0, %s287
      %s290 = sphi 0, %s289
      %s304 = sphi 0, %s290
      %s310 = sphi 0, %s312
      %s313 = sphi 0, %s310
      %s314 = sphi 0, %s313
      %s330 = sphi 0, %s314
    $region4: #{tpu_custom_call.1} parent=1 // loop_header_branch
      %25 = sbr.rel (%p23) target = $region8
    $region5: #{tpu_custom_call.1} parent=1 // loop_body
      %s27 = ssub.s32 %s22, 1
      %s28 = ssub.s32 %s22, 2
      %s29 = sadd.s32 %s22, 1
      %s30 = ssub.s32 %s22, %s29
      %p31 = scmp.eq.s32.totalorder %s30, 0
      %s33 = sadd.s32 %s32, 1
      %s34 = scalar_select %p31, %s32, %s33
      %p37 = pneg %p31
      %p38 = scmp.eq.s32.totalorder %s22, 1
      %p39 = por %p37, %p38
      %p40 = scmp.ne.s32.totalorder %s32, %s35
      %p41 = scmp.eq.s32.totalorder %s22, 0
      %p42 = por %p40, %p41
      %p43 = scmp.ne.s32.totalorder %s32, %s35
      %p44 = scmp.eq.s32.totalorder %s27, 1
      %p45 = por %p43, %p44
      %p46 = scmp.ne.s32.totalorder %s35, %s36
      %p47 = scmp.eq.s32.totalorder %s27, 0
      %p48 = por %p46, %p47
      %p49 = scmp.ne.s32.totalorder %s35, %s36
      %p50 = scmp.eq.s32.totalorder %s28, 1
      %p51 = por %p49, %p50
      %p53 = scmp.ne.s32.totalorder %s36, %s52
      %p54 = scmp.eq.s32.totalorder %s28, 0
      %p55 = por %p53, %p54
      %s57 = sadd.s32 %s56, 1
      %p60 = scmp.eq.s32.totalorder %s22, 1
      %p61 = scmp.ne.s32.totalorder %s56, %s58
      %p62 = scmp.eq.s32.totalorder %s22, 0
      %p63 = por %p61, %p62
      %p64 = scmp.ne.s32.totalorder %s56, %s58
      %p65 = scmp.eq.s32.totalorder %s27, 1
      %p66 = por %p64, %p65
      %p67 = scmp.ne.s32.totalorder %s58, %s59
      %p68 = scmp.eq.s32.totalorder %s27, 0
      %p69 = por %p67, %p68
      %p70 = scmp.ne.s32.totalorder %s58, %s59
      %p71 = scmp.eq.s32.totalorder %s28, 1
      %p72 = por %p70, %p71
      %p74 = scmp.ne.s32.totalorder %s59, %s73
      %p75 = scmp.eq.s32.totalorder %s28, 0
      %p76 = por %p74, %p75
      %s78 = sadd.s32 %s77, 1
      %p81 = scmp.eq.s32.totalorder %s22, 1
      %p82 = scmp.ne.s32.totalorder %s77, %s79
      %p83 = scmp.eq.s32.totalorder %s22, 0
      %p84 = por %p82, %p83
      %p85 = scmp.ne.s32.totalorder %s77, %s79
      %p86 = scmp.eq.s32.totalorder %s27, 1
      %p87 = por %p85, %p86
      %p88 = scmp.ne.s32.totalorder %s79, %s80
      %p89 = scmp.eq.s32.totalorder %s27, 0
      %p90 = por %p88, %p89
      %p91 = scmp.ne.s32.totalorder %s79, %s80
      %p92 = scmp.eq.s32.totalorder %s28, 1
      %p93 = por %p91, %p92
      %p95 = scmp.ne.s32.totalorder %s80, %s94
      %p96 = scmp.eq.s32.totalorder %s28, 0
      %p97 = por %p95, %p96
      %s99 = sadd.s32 %s98, 1
      %p102 = scmp.eq.s32.totalorder %s22, 1
      %p103 = scmp.ne.s32.totalorder %s98, %s100
      %p104 = scmp.eq.s32.totalorder %s22, 0
      %p105 = por %p103, %p104
      %p106 = scmp.ne.s32.totalorder %s98, %s100
      %p107 = scmp.eq.s32.totalorder %s27, 1
      %p108 = por %p106, %p107
      %p109 = scmp.ne.s32.totalorder %s100, %s101
      %p110 = scmp.eq.s32.totalorder %s27, 0
      %p111 = por %p109, %p110
      %p112 = scmp.ne.s32.totalorder %s100, %s101
      %p113 = scmp.eq.s32.totalorder %s28, 1
      %p114 = por %p112, %p113
      %p116 = scmp.ne.s32.totalorder %s101, %s115
      %p117 = scmp.eq.s32.totalorder %s28, 0
      %p118 = por %p116, %p117
      %s120 = sadd.s32 %s119, 1
      %p123 = scmp.eq.s32.totalorder %s22, 1
      %p124 = scmp.ne.s32.totalorder %s119, %s121
      %p125 = scmp.eq.s32.totalorder %s22, 0
      %p126 = por %p124, %p125
      %p127 = scmp.ne.s32.totalorder %s119, %s121
      %p128 = scmp.eq.s32.totalorder %s27, 1
      %p129 = por %p127, %p128
      %p130 = scmp.ne.s32.totalorder %s121, %s122
      %p131 = scmp.eq.s32.totalorder %s27, 0
      %p132 = por %p130, %p131
      %p133 = scmp.ne.s32.totalorder %s121, %s122
      %p134 = scmp.eq.s32.totalorder %s28, 1
      %p135 = por %p133, %p134
      %p137 = scmp.ne.s32.totalorder %s122, %s136
      %p138 = scmp.eq.s32.totalorder %s28, 0
      %p139 = por %p137, %p138
      %s141 = sadd.s32 %s140, 1
      %p144 = scmp.eq.s32.totalorder %s22, 1
      %p145 = scmp.ne.s32.totalorder %s140, %s142
      %p146 = scmp.eq.s32.totalorder %s22, 0
      %p147 = por %p145, %p146
      %p148 = scmp.ne.s32.totalorder %s140, %s142
      %p149 = scmp.eq.s32.totalorder %s27, 1
      %p150 = por %p148, %p149
      %p151 = scmp.ne.s32.totalorder %s142, %s143
      %p152 = scmp.eq.s32.totalorder %s27, 0
      %p153 = por %p151, %p152
      %p154 = scmp.ne.s32.totalorder %s142, %s143
      %p155 = scmp.eq.s32.totalorder %s28, 1
      %p156 = por %p154, %p155
      %p158 = scmp.ne.s32.totalorder %s143, %s157
      %p159 = scmp.eq.s32.totalorder %s28, 0
      %p160 = por %p158, %p159
      %s162 = sadd.s32 %s161, 1
      %p165 = scmp.eq.s32.totalorder %s22, 1
      %p166 = scmp.ne.s32.totalorder %s161, %s163
      %p167 = scmp.eq.s32.totalorder %s22, 0
      %p168 = por %p166, %p167
      %p169 = scmp.ne.s32.totalorder %s161, %s163
      %p170 = scmp.eq.s32.totalorder %s27, 1
      %p171 = por %p169, %p170
      %p172 = scmp.ne.s32.totalorder %s163, %s164
      %p173 = scmp.eq.s32.totalorder %s27, 0
      %p174 = por %p172, %p173
      %p175 = scmp.ne.s32.totalorder %s163, %s164
      %p176 = scmp.eq.s32.totalorder %s28, 1
      %p177 = por %p175, %p176
      %p179 = scmp.ne.s32.totalorder %s164, %s178
      %p180 = scmp.eq.s32.totalorder %s28, 0
      %p181 = por %p179, %p180
      %s183 = sadd.s32 %s182, 1
      %p186 = scmp.eq.s32.totalorder %s22, 1
      %p187 = scmp.ne.s32.totalorder %s182, %s184
      %p188 = scmp.eq.s32.totalorder %s22, 0
      %p189 = por %p187, %p188
      %p190 = scmp.ne.s32.totalorder %s182, %s184
      %p191 = scmp.eq.s32.totalorder %s27, 1
      %p192 = por %p190, %p191
      %p193 = scmp.ne.s32.totalorder %s184, %s185
      %p194 = scmp.eq.s32.totalorder %s27, 0
      %p195 = por %p193, %p194
      %p196 = scmp.ne.s32.totalorder %s184, %s185
      %p197 = scmp.eq.s32.totalorder %s28, 1
      %p198 = por %p196, %p197
      %p200 = scmp.ne.s32.totalorder %s185, %s199
      %p201 = scmp.eq.s32.totalorder %s28, 0
      %p202 = por %p200, %p201
      %s204 = sadd.s32 %s203, 1
      %p207 = scmp.eq.s32.totalorder %s22, 1
      %p208 = scmp.ne.s32.totalorder %s203, %s205
      %p209 = scmp.eq.s32.totalorder %s22, 0
      %p210 = por %p208, %p209
      %p211 = scmp.ne.s32.totalorder %s203, %s205
      %p212 = scmp.eq.s32.totalorder %s27, 1
      %p213 = por %p211, %p212
      %p214 = scmp.ne.s32.totalorder %s205, %s206
      %p215 = scmp.eq.s32.totalorder %s27, 0
      %p216 = por %p214, %p215
      %p217 = scmp.ne.s32.totalorder %s205, %s206
      %p218 = scmp.eq.s32.totalorder %s28, 1
      %p219 = por %p217, %p218
      %p221 = scmp.ne.s32.totalorder %s206, %s220
      %p222 = scmp.eq.s32.totalorder %s28, 0
      %p223 = por %p221, %p222
      %s225 = sadd.s32 %s224, 1
      %p228 = scmp.eq.s32.totalorder %s22, 1
      %p229 = scmp.ne.s32.totalorder %s224, %s226
      %p230 = scmp.eq.s32.totalorder %s22, 0
      %p231 = por %p229, %p230
      %p232 = scmp.ne.s32.totalorder %s224, %s226
      %p233 = scmp.eq.s32.totalorder %s27, 1
      %p234 = por %p232, %p233
      %p235 = scmp.ne.s32.totalorder %s226, %s227
      %p236 = scmp.eq.s32.totalorder %s27, 0
      %p237 = por %p235, %p236
      %p238 = scmp.ne.s32.totalorder %s226, %s227
      %p239 = scmp.eq.s32.totalorder %s28, 1
      %p240 = por %p238, %p239
      %p242 = scmp.ne.s32.totalorder %s227, %s241
      %p243 = scmp.eq.s32.totalorder %s28, 0
      %p244 = por %p242, %p243
      %s246 = sadd.s32 %s245, 1
      %p249 = scmp.eq.s32.totalorder %s22, 1
      %p250 = scmp.ne.s32.totalorder %s245, %s247
      %p251 = scmp.eq.s32.totalorder %s22, 0
      %p252 = por %p250, %p251
      %p253 = scmp.ne.s32.totalorder %s245, %s247
      %p254 = scmp.eq.s32.totalorder %s27, 1
      %p255 = por %p253, %p254
      %p256 = scmp.ne.s32.totalorder %s247, %s248
      %p257 = scmp.eq.s32.totalorder %s27, 0
      %p258 = por %p256, %p257
      %p259 = scmp.ne.s32.totalorder %s247, %s248
      %p260 = scmp.eq.s32.totalorder %s28, 1
      %p261 = por %p259, %p260
      %p263 = scmp.ne.s32.totalorder %s248, %s262
      %p264 = scmp.eq.s32.totalorder %s28, 0
      %p265 = por %p263, %p264
      %s267 = sadd.s32 %s266, 1
      %p270 = scmp.eq.s32.totalorder %s22, 1
      %p271 = scmp.ne.s32.totalorder %s266, %s268
      %p272 = scmp.eq.s32.totalorder %s22, 0
      %p273 = por %p271, %p272
      %p274 = scmp.ne.s32.totalorder %s266, %s268
      %p275 = scmp.eq.s32.totalorder %s27, 1
      %p276 = por %p274, %p275
      %p277 = scmp.ne.s32.totalorder %s268, %s269
      %p278 = scmp.eq.s32.totalorder %s27, 0
      %p279 = por %p277, %p278
      %p280 = scmp.ne.s32.totalorder %s268, %s269
      %p281 = scmp.eq.s32.totalorder %s28, 1
      %p282 = por %p280, %p281
      %p284 = scmp.ne.s32.totalorder %s269, %s283
      %p285 = scmp.eq.s32.totalorder %s28, 0
      %p286 = por %p284, %p285
      %s288 = sadd.s32 %s287, 1
      %p291 = scmp.eq.s32.totalorder %s22, 1
      %p292 = scmp.ne.s32.totalorder %s287, %s289
      %p293 = scmp.eq.s32.totalorder %s22, 0
      %p294 = por %p292, %p293
      %p295 = scmp.ne.s32.totalorder %s287, %s289
      %p296 = scmp.eq.s32.totalorder %s27, 1
      %p297 = por %p295, %p296
      %p298 = scmp.ne.s32.totalorder %s289, %s290
      %p299 = scmp.eq.s32.totalorder %s27, 0
      %p300 = por %p298, %p299
      %p301 = scmp.ne.s32.totalorder %s289, %s290
      %p302 = scmp.eq.s32.totalorder %s28, 1
      %p303 = por %p301, %p302
      %p305 = scmp.ne.s32.totalorder %s290, %s304
      %p306 = scmp.eq.s32.totalorder %s28, 0
      %p307 = por %p305, %p306
      %s308 = ssub.s32 %s22, %s29
      %p309 = scmp.eq.s32.totalorder %s308, 0
      %s311 = sadd.s32 %s310, 1
      %s312 = scalar_select %p309, %s310, %s311
      %p315 = pneg %p309
      %p316 = scmp.eq.s32.totalorder %s22, 1
      %p317 = por %p315, %p316
      %p318 = scmp.ne.s32.totalorder %s310, %s313
      %p319 = scmp.eq.s32.totalorder %s22, 0
      %p320 = por %p318, %p319
      %p321 = scmp.ne.s32.totalorder %s310, %s313
      %p322 = scmp.eq.s32.totalorder %s27, 1
      %p323 = por %p321, %p322
      %p324 = scmp.ne.s32.totalorder %s313, %s314
      %p325 = scmp.eq.s32.totalorder %s27, 0
      %p326 = por %p324, %p325
      %p327 = scmp.ne.s32.totalorder %s313, %s314
      %p328 = scmp.eq.s32.totalorder %s28, 1
      %p329 = por %p327, %p328
      %p331 = scmp.ne.s32.totalorder %s314, %s330
      %p332 = scmp.eq.s32.totalorder %s28, 0
      %p333 = por %p331, %p332
      %p334 = scmp.le.s32.totalorder 1, %s22
      %p335 = scmp.lt.s32.totalorder %s22, 3
      %p336 = pnand %p334, %p335
      %p337 = pneg %p336
      // Predicated region
      $region9: #{tpu_custom_call.1} parent=5 // pred_check
        _
      $region10: #{tpu_custom_call.1} parent=5 // pred_check_branch
        %339 = sbr.rel (%p336) target = $region12
      $region11: #{tpu_custom_call.1} parent=5 // pred_region
        %s340 = ssub.s32 %s22, 1
        // Predicated region
        $region13: #{tpu_custom_call.1} parent=11 // pred_check
          %p341 = pneg %p69
        $region14: #{tpu_custom_call.1} parent=11 // pred_check_branch
          %343 = sbr.rel (%p341) target = $region16
        $region15: #{tpu_custom_call.1} parent=11 // pred_region
          _
        $region16: #{tpu_custom_call.1} parent=11 // pred_fallthru
          _
        // Predicated region
        $region17: #{tpu_custom_call.1} parent=11 // pred_check
          %p344 = pneg %p90
        $region18: #{tpu_custom_call.1} parent=11 // pred_check_branch
          %346 = sbr.rel (%p344) target = $region20
        $region19: #{tpu_custom_call.1} parent=11 // pred_region
          _
        $region20: #{tpu_custom_call.1} parent=11 // pred_fallthru
          _
        // Predicated region
        $region21: #{tpu_custom_call.1} parent=11 // pred_check
          %p347 = pneg %p111
        $region22: #{tpu_custom_call.1} parent=11 // pred_check_branch
          %349 = sbr.rel (%p347) target = $region24
        $region23: #{tpu_custom_call.1} parent=11 // pred_region
          _
        $region24: #{tpu_custom_call.1} parent=11 // pred_fallthru
          _
        // Predicated region
        $region25: #{tpu_custom_call.1} parent=11 // pred_check
          %p350 = pneg %p132
        $region26: #{tpu_custom_call.1} parent=11 // pred_check_branch
          %352 = sbr.rel (%p350) target = $region28
        $region27: #{tpu_custom_call.1} parent=11 // pred_region
          _
        $region28: #{tpu_custom_call.1} parent=11 // pred_fallthru
          _
        // Predicated region
        $region29: #{tpu_custom_call.1} parent=11 // pred_check
          %p353 = pneg %p153
        $region30: #{tpu_custom_call.1} parent=11 // pred_check_branch
          %355 = sbr.rel (%p353) target = $region32
        $region31: #{tpu_custom_call.1} parent=11 // pred_region
          _
        $region32: #{tpu_custom_call.1} parent=11 // pred_fallthru
          _
        // Predicated region
        $region33: #{tpu_custom_call.1} parent=11 // pred_check
          %p356 = pneg %p174
        $region34: #{tpu_custom_call.1} parent=11 // pred_check_branch
          %358 = sbr.rel (%p356) target = $region36
        $region35: #{tpu_custom_call.1} parent=11 // pred_region
          _
        $region36: #{tpu_custom_call.1} parent=11 // pred_fallthru
          _
        // Predicated region
        $region37: #{tpu_custom_call.1} parent=11 // pred_check
          %p359 = pneg %p195
        $region38: #{tpu_custom_call.1} parent=11 // pred_check_branch
          %361 = sbr.rel (%p359) target = $region40
        $region39: #{tpu_custom_call.1} parent=11 // pred_region
          _
        $region40: #{tpu_custom_call.1} parent=11 // pred_fallthru
          _
        // Predicated region
        $region41: #{tpu_custom_call.1} parent=11 // pred_check
          %p362 = pneg %p216
        $region42: #{tpu_custom_call.1} parent=11 // pred_check_branch
          %364 = sbr.rel (%p362) target = $region44
        $region43: #{tpu_custom_call.1} parent=11 // pred_region
          _
        $region44: #{tpu_custom_call.1} parent=11 // pred_fallthru
          _
        // Predicated region
        $region45: #{tpu_custom_call.1} parent=11 // pred_check
          %p365 = pneg %p237
        $region46: #{tpu_custom_call.1} parent=11 // pred_check_branch
          %367 = sbr.rel (%p365) target = $region48
        $region47: #{tpu_custom_call.1} parent=11 // pred_region
          _
        $region48: #{tpu_custom_call.1} parent=11 // pred_fallthru
          _
        // Predicated region
        $region49: #{tpu_custom_call.1} parent=11 // pred_check
          %p368 = pneg %p258
        $region50: #{tpu_custom_call.1} parent=11 // pred_check_branch
          %370 = sbr.rel (%p368) target = $region52
        $region51: #{tpu_custom_call.1} parent=11 // pred_region
          _
        $region52: #{tpu_custom_call.1} parent=11 // pred_fallthru
          _
        // Predicated region
        $region53: #{tpu_custom_call.1} parent=11 // pred_check
          %p371 = pneg %p279
        $region54: #{tpu_custom_call.1} parent=11 // pred_check_branch
          %373 = sbr.rel (%p371) target = $region56
        $region55: #{tpu_custom_call.1} parent=11 // pred_region
          _
        $region56: #{tpu_custom_call.1} parent=11 // pred_fallthru
          _
        // Predicated region
        $region57: #{tpu_custom_call.1} parent=11 // pred_check
          %p374 = pneg %p300
        $region58: #{tpu_custom_call.1} parent=11 // pred_check_branch
          %376 = sbr.rel (%p374) target = $region60
        $region59: #{tpu_custom_call.1} parent=11 // pred_region
          _
        $region60: #{tpu_custom_call.1} parent=11 // pred_fallthru
          _
      $region12: #{tpu_custom_call.1} parent=5 // pred_fallthru
        _
      %p377 = scmp.lt.s32.totalorder %s22, 2
      // Predicated region
      $region61: #{tpu_custom_call.1} parent=5 // pred_check
        %p378 = pneg %p377
      $region62: #{tpu_custom_call.1} parent=5 // pred_check_branch
        %380 = sbr.rel (%p378) target = $region64
      $region63: #{tpu_custom_call.1} parent=5 // pred_region
        // Predicated region
        $region65: #{tpu_custom_call.1} parent=63 // pred_check
          %p381 = pneg %p42
        $region66: #{tpu_custom_call.1} parent=63 // pred_check_branch
          %383 = sbr.rel (%p381) target = $region68
        $region67: #{tpu_custom_call.1} parent=63 // pred_region
          %s384 = smul.u32 2, %s22
          %p385 = scmp.lt.s32.totalorder %s384, 3
          %s386 = scalar_select %p385, %s384, 3
          %s387 = smul.addr %s386, 8
          %s388 = scalar_lea.vmem %s0, %s387
          %s389 = smul.u32 2, %s22
        $region68: #{tpu_custom_call.1} parent=63 // pred_fallthru
          _
      $region64: #{tpu_custom_call.1} parent=5 // pred_fallthru
        _
      %p390 = scmp.le.s32.totalorder 1, %s22
      %p391 = scmp.lt.s32.totalorder %s22, 3
      %p392 = pnand %p390, %p391
      %p393 = pneg %p392
      // Predicated region
      $region69: #{tpu_custom_call.1} parent=5 // pred_check
        _
      $region70: #{tpu_custom_call.1} parent=5 // pred_check_branch
        %395 = sbr.rel (%p392) target = $region72
      $region71: #{tpu_custom_call.1} parent=5 // pred_region
        %s396 = ssub.s32 %s22, 1
        %s397 = smul.u32 2, %s27
        %p398 = scmp.lt.s32.totalorder %s397, 3
        %s399 = scalar_select %p398, %s397, 3
        %s400 = smul.addr %s399, 8
        %s401 = scalar_lea.vmem %s0, %s400
        %p402 = pneg %p48
        %p403 = pneg %p45
        %p404 = pneg %p69
        %p405 = pneg %p66
        %p406 = pneg %p90
        %p407 = pneg %p87
        %p408 = pneg %p111
        %p409 = pneg %p108
        %p410 = pneg %p132
        %p411 = pneg %p129
        %p412 = pneg %p153
        %p413 = pneg %p150
        %p414 = pneg %p174
        %p415 = pneg %p171
        %p416 = pneg %p195
        %p417 = pneg %p192
        %p418 = pneg %p216
        %p419 = pneg %p213
        %p420 = pneg %p237
        %p421 = pneg %p234
        %p422 = pneg %p258
        %p423 = pneg %p255
        %p424 = pneg %p279
        %p425 = pneg %p276
        %p426 = pneg %p300
        %p427 = pneg %p297
        %p428 = pneg %p326
        %p429 = pneg %p323
        %s430 = sand.u32 %s313, 1
        %s431 = scalar_lea.sflag [#allocation3], %s430
        %s432 = sand.u32 %s313, 1
        %s433 = smul.addr %s432, 32
        %s434 = scalar_lea.vmem [#allocation2], %s433
        %s435 = smul.u32 2, %s27
        %p436 = scmp.lt.s32.totalorder %s435, 3
        %s437 = scalar_select %p436, %s435, 3
        %s438 = smul.addr %s437, 8
        %s439 = scalar_lea.vmem %s0, %s438
        %s440 = smul.u32 2, %s27
        %s441 = smul.u32 2, %s27
        %v442 = vld [vmem:[%s439] sm:$0xff]
        %v443 = vld [vmem:[%s439 + $0x8] sm:$0xff]
        %v444 = vmax.f32 %v442, 0.0
        %v445 = vmax.f32 %v443, 0.0
        %s446 = scalar_lea.vmem %s2, 32
        %v447 = vld [vmem:[%s446] sm:$0xff]
        %449 = vset.pattern.permute.xlu0 0
        %450 = vperm.xlu0 %449, %v447
        %v451 = vpop.permute.xlu0 %450
        %v453 = vmul.f32 %v451, %v444
        %v454 = vmul.f32 %v451, %v445
        %455 = vrot.lane.b32.xlu0 %v444, 17
        %v456 = vpop.permute.xlu0 %455
        %457 = vrot.lane.b32.xlu0 %v445, 17
        %v458 = vpop.permute.xlu0 %457
        %v459 = vlaneseq
        %v460 = vand.u32 %v459, 127
        %vm461 = vcmp.lt.s32.totalorder %v460, 17
        %v462 = vsel %vm461, %v456, %v458
        %v463 = vsel %vm461, %v458, %v456
        %v464 = vld [vmem:[%s2] sm:$0xff]
        %v465 = vld [vmem:[%s1] sm:$0x3]
        %v467 = vlaneseq
        %v468 = vshrl.u32 %v467, 7
        %v469 = vsub.s32 0, %v468
        %v470 = vrot.slane %v465, %v469
        %v471 = vlaneseq
        %v472 = vshrl.u32 %v471, 7
        %v473 = vsub.s32 1, %v472
        %v474 = vrot.slane %v465, %v473
        %v477 = vmul.f32 %v470, %v463
        %v478 = vmul.f32 %v474, %v462
        %480 = vset.pattern.permute.xlu0 0
        %481 = vperm.xlu0 %480, %v464
        %v482 = vpop.permute.xlu0 %481
        %v484 = vmul.f32 %v482, %v477
        %v485 = vmul.f32 %v482, %v478
        %v486 = vadd.f32 %v453, %v484
        %v487 = vadd.f32 %v454, %v485
        %488 = vrot.lane.b32.xlu0 %v444, 16
        %v489 = vpop.permute.xlu0 %488
        %490 = vrot.lane.b32.xlu0 %v445, 16
        %v491 = vpop.permute.xlu0 %490
        %vm492 = vcmp.lt.s32.totalorder %v460, 16
        %v493 = vsel %vm492, %v489, %v491
        %v494 = vsel %vm492, %v491, %v489
        %s495 = scalar_lea.vmem %s2, 8
        %v496 = vld [vmem:[%s495] sm:$0xff]
        %s497 = scalar_lea.vmem %s1, 2
        %v498 = vld [vmem:[%s497] sm:$0x3]
        %v500 = vlaneseq
        %v501 = vshrl.u32 %v500, 7
        %v502 = vsub.s32 0, %v501
        %v503 = vrot.slane %v498, %v502
        %v504 = vlaneseq
        %v505 = vshrl.u32 %v504, 7
        %v506 = vsub.s32 1, %v505
        %v507 = vrot.slane %v498, %v506
        %v510 = vmul.f32 %v503, %v494
        %v511 = vmul.f32 %v507, %v493
        %513 = vset.pattern.permute.xlu0 0
        %514 = vperm.xlu0 %513, %v496
        %v515 = vpop.permute.xlu0 %514
        %v517 = vmul.f32 %v515, %v510
        %v518 = vmul.f32 %v515, %v511
        %v519 = vadd.f32 %v517, 0.0
        %v520 = vadd.f32 %v518, 0.0
        %521 = vrot.lane.b32.xlu0 %v444, 15
        %v522 = vpop.permute.xlu0 %521
        %523 = vrot.lane.b32.xlu0 %v445, 15
        %v524 = vpop.permute.xlu0 %523
        %vm525 = vcmp.lt.s32.totalorder %v460, 15
        %v526 = vsel %vm525, %v522, %v524
        %v527 = vsel %vm525, %v524, %v522
        %s528 = scalar_lea.vmem %s2, 16
        %v529 = vld [vmem:[%s528] sm:$0xff]
        %s530 = scalar_lea.vmem %s1, 4
        %v531 = vld [vmem:[%s530] sm:$0x3]
        %v533 = vlaneseq
        %v534 = vshrl.u32 %v533, 7
        %v535 = vsub.s32 0, %v534
        %v536 = vrot.slane %v531, %v535
        %v537 = vlaneseq
        %v538 = vshrl.u32 %v537, 7
        %v539 = vsub.s32 1, %v538
        %v540 = vrot.slane %v531, %v539
        %v543 = vmul.f32 %v536, %v527
        %v544 = vmul.f32 %v540, %v526
        %546 = vset.pattern.permute.xlu0 0
        %547 = vperm.xlu0 %546, %v529
        %v548 = vpop.permute.xlu0 %547
        %v550 = vmul.f32 %v548, %v543
        %v551 = vmul.f32 %v548, %v544
        %v552 = vadd.f32 %v486, %v550
        %v553 = vadd.f32 %v487, %v551
        %554 = vrot.lane.b32.xlu0 %v444, 1
        %v555 = vpop.permute.xlu0 %554
        %556 = vrot.lane.b32.xlu0 %v445, 1
        %v557 = vpop.permute.xlu0 %556
        %vm558 = vcmp.lt.s32.totalorder %v460, 1
        %v559 = vsel %vm558, %v555, %v557
        %v560 = vsel %vm558, %v557, %v555
        %s561 = scalar_lea.vmem %s2, 24
        %v562 = vld [vmem:[%s561] sm:$0xff]
        %s563 = scalar_lea.vmem %s1, 6
        %v564 = vld [vmem:[%s563] sm:$0x3]
        %v566 = vlaneseq
        %v567 = vshrl.u32 %v566, 7
        %v568 = vsub.s32 0, %v567
        %v569 = vrot.slane %v564, %v568
        %v570 = vlaneseq
        %v571 = vshrl.u32 %v570, 7
        %v572 = vsub.s32 1, %v571
        %v573 = vrot.slane %v564, %v572
        %v576 = vmul.f32 %v569, %v560
        %v577 = vmul.f32 %v573, %v559
        %579 = vset.pattern.permute.xlu0 0
        %580 = vperm.xlu0 %579, %v562
        %v581 = vpop.permute.xlu0 %580
        %v583 = vmul.f32 %v581, %v576
        %v584 = vmul.f32 %v581, %v577
        %v585 = vadd.f32 %v519, %v583
        %v586 = vadd.f32 %v520, %v584
        %587 = vrot.lane.b32.xlu0 %v444, 127
        %v588 = vpop.permute.xlu0 %587
        %589 = vrot.lane.b32.xlu0 %v445, 127
        %v590 = vpop.permute.xlu0 %589
        %vm591 = vcmp.lt.s32.totalorder %v460, 127
        %v592 = vsel %vm591, %v588, %v590
        %v593 = vsel %vm591, %v590, %v588
        %s594 = scalar_lea.vmem %s2, 40
        %v595 = vld [vmem:[%s594] sm:$0xff]
        %s596 = scalar_lea.vmem %s1, 10
        %v597 = vld [vmem:[%s596] sm:$0x3]
        %v599 = vlaneseq
        %v600 = vshrl.u32 %v599, 7
        %v601 = vsub.s32 0, %v600
        %v602 = vrot.slane %v597, %v601
        %v603 = vlaneseq
        %v604 = vshrl.u32 %v603, 7
        %v605 = vsub.s32 1, %v604
        %v606 = vrot.slane %v597, %v605
        %v609 = vmul.f32 %v602, %v592
        %v610 = vmul.f32 %v606, %v593
        %612 = vset.pattern.permute.xlu0 0
        %613 = vperm.xlu0 %612, %v595
        %v614 = vpop.permute.xlu0 %613
        %v616 = vmul.f32 %v614, %v609
        %v617 = vmul.f32 %v614, %v610
        %v618 = vadd.f32 %v552, %v616
        %v619 = vadd.f32 %v553, %v617
        %620 = vrot.lane.b32.xlu0 %v444, 113
        %v621 = vpop.permute.xlu0 %620
        %622 = vrot.lane.b32.xlu0 %v445, 113
        %v623 = vpop.permute.xlu0 %622
        %vm624 = vcmp.lt.s32.totalorder %v460, 113
        %v625 = vsel %vm624, %v621, %v623
        %v626 = vsel %vm624, %v623, %v621
        %s627 = scalar_lea.vmem %s2, 48
        %v628 = vld [vmem:[%s627] sm:$0xff]
        %s629 = scalar_lea.vmem %s1, 12
        %v630 = vld [vmem:[%s629] sm:$0x3]
        %v632 = vlaneseq
        %v633 = vshrl.u32 %v632, 7
        %v634 = vsub.s32 0, %v633
        %v635 = vrot.slane %v630, %v634
        %v636 = vlaneseq
        %v637 = vshrl.u32 %v636, 7
        %v638 = vsub.s32 1, %v637
        %v639 = vrot.slane %v630, %v638
        %v642 = vmul.f32 %v635, %v625
        %v643 = vmul.f32 %v639, %v626
        %645 = vset.pattern.permute.xlu0 0
        %646 = vperm.xlu0 %645, %v628
        %v647 = vpop.permute.xlu0 %646
        %v649 = vmul.f32 %v647, %v642
        %v650 = vmul.f32 %v647, %v643
        %v651 = vadd.f32 %v585, %v649
        %v652 = vadd.f32 %v586, %v650
        %653 = vrot.lane.b32.xlu0 %v444, 112
        %v654 = vpop.permute.xlu0 %653
        %655 = vrot.lane.b32.xlu0 %v445, 112
        %v656 = vpop.permute.xlu0 %655
        %vm657 = vcmp.lt.s32.totalorder %v460, 112
        %v658 = vsel %vm657, %v654, %v656
        %v659 = vsel %vm657, %v656, %v654
        %s660 = scalar_lea.vmem %s2, 56
        %v661 = vld [vmem:[%s660] sm:$0xff]
        %s662 = scalar_lea.vmem %s1, 14
        %v663 = vld [vmem:[%s662] sm:$0x3]
        %v665 = vlaneseq
        %v666 = vshrl.u32 %v665, 7
        %v667 = vsub.s32 0, %v666
        %v668 = vrot.slane %v663, %v667
        %v669 = vlaneseq
        %v670 = vshrl.u32 %v669, 7
        %v671 = vsub.s32 1, %v670
        %v672 = vrot.slane %v663, %v671
        %v675 = vmul.f32 %v668, %v658
        %v676 = vmul.f32 %v672, %v659
        %678 = vset.pattern.permute.xlu0 0
        %679 = vperm.xlu0 %678, %v661
        %v680 = vpop.permute.xlu0 %679
        %v682 = vmul.f32 %v680, %v675
        %v683 = vmul.f32 %v680, %v676
        %v684 = vadd.f32 %v618, %v682
        %v685 = vadd.f32 %v619, %v683
        %686 = vrot.lane.b32.xlu0 %v444, 111
        %v687 = vpop.permute.xlu0 %686
        %688 = vrot.lane.b32.xlu0 %v445, 111
        %v689 = vpop.permute.xlu0 %688
        %vm690 = vcmp.lt.s32.totalorder %v460, 111
        %v691 = vsel %vm690, %v687, %v689
        %v692 = vsel %vm690, %v689, %v687
        %s693 = scalar_lea.vmem %s2, 64
        %v694 = vld [vmem:[%s693] sm:$0xff]
        %s695 = scalar_lea.vmem %s1, 16
        %v696 = vld [vmem:[%s695] sm:$0x3]
        %v698 = vlaneseq
        %v699 = vshrl.u32 %v698, 7
        %v700 = vsub.s32 0, %v699
        %v701 = vrot.slane %v696, %v700
        %v702 = vlaneseq
        %v703 = vshrl.u32 %v702, 7
        %v704 = vsub.s32 1, %v703
        %v705 = vrot.slane %v696, %v704
        %v708 = vmul.f32 %v701, %v691
        %v709 = vmul.f32 %v705, %v692
        %711 = vset.pattern.permute.xlu0 0
        %712 = vperm.xlu0 %711, %v694
        %v713 = vpop.permute.xlu0 %712
        %v715 = vmul.f32 %v713, %v708
        %v716 = vmul.f32 %v713, %v709
        %v717 = vadd.f32 %v651, %v715
        %v718 = vadd.f32 %v652, %v716
        %v719 = vadd.f32 %v684, %v717
        %v720 = vadd.f32 %v685, %v718
        %v721 = vld [vmem:[%s3] sm:$0xff]
        %v722 = vld [vmem:[%s3 + $0x8] sm:$0xff]
        %v723 = vld [vmem:[%s4] sm:$0xff]
        %v724 = vld [vmem:[%s4 + $0x8] sm:$0xff]
        %726 = vset.pattern.permute.xlu0 0
        %727 = vperm.xlu0 %726, %v723
        %v728 = vpop.permute.xlu0 %727
        %731 = vset.pattern.permute.xlu0 0
        %732 = vperm.xlu0 %731, %v724
        %v733 = vpop.permute.xlu0 %732
        %vm735 = vcmask 64512
        %v737 = vsel %vm735, %v721, 0
        %v740 = vsel %vm735, %v722, 0
        %742 = vmatprep.subr.mxu0 %v720
        %743 = vmatpush1.msra.mxu0 %v719
        %744 = vmatprep.subr.mxu0 0.0
        %745 = vmatpush1.msra.mxu0 0.0
        %746 = vmatprep.subr.mxu0 0.0
        %747 = vmatpush1.msra.mxu0 0.0
        %748 = vmatprep.subr.mxu0 0.0
        %749 = vmatpush1.msra.mxu0 0.0
        %750 = vmatprep.subr.mxu0 0.0
        %751 = vmatpush1.msra.mxu0 0.0
        %752 = vmatprep.subr.mxu0 0.0
        %753 = vmatpush1.msra.mxu0 0.0
        %754 = vmatprep.subr.mxu0 0.0
        %755 = vmatpush1.msra.mxu0 0.0
        %756 = vmatprep.subr.mxu0 0.0
        %757 = vmatpush1.msra.mxu0 0.0
        %758 = vmatprep.subr.mxu0 0.0
        %759 = vmatpush1.msra.mxu0 0.0
        %760 = vmatprep.subr.mxu0 0.0
        %761 = vmatpush1.msra.mxu0 0.0
        %762 = vmatprep.subr.mxu0 0.0
        %763 = vmatpush1.msra.mxu0 0.0
        %764 = vmatprep.subr.mxu0 0.0
        %765 = vmatpush1.msra.mxu0 0.0
        %766 = vmatprep.subr.mxu0 0.0
        %767 = vmatpush1.msra.mxu0 0.0
        %768 = vmatprep.subr.mxu0 0.0
        %769 = vmatpush1.msra.mxu0 0.0
        %770 = vmatprep.subr.mxu0 0.0
        %771 = vmatpush1.msra.mxu0 0.0
        %772 = vmatprep.subr.mxu0 0.0
        %773 = vmatpush1.msra.mxu0 0.0
        %774 = vmatprep.subr.mxu0 0.0
        %775 = vmatpush1.msra.mxu0 0.0
        %776 = vmatprep.subr.mxu0 0.0
        %777 = vmatpush1.msra.mxu0 0.0
        %778 = vmatprep.subr.mxu0 0.0
        %779 = vmatpush1.msra.mxu0 0.0
        %780 = vmatprep.subr.mxu0 0.0
        %781 = vmatpush1.msra.mxu0 0.0
        %782 = vmatprep.subr.mxu0 0.0
        %783 = vmatpush1.msra.mxu0 0.0
        %784 = vmatprep.subr.mxu0 0.0
        %785 = vmatpush1.msra.mxu0 0.0
        %786 = vmatprep.subr.mxu0 0.0
        %787 = vmatpush1.msra.mxu0 0.0
        %788 = vmatprep.subr.mxu0 0.0
        %789 = vmatpush1.msra.mxu0 0.0
        %790 = vmatprep.subr.mxu0 0.0
        %791 = vmatpush1.msra.mxu0 0.0
        %792 = vmatprep.subr.mxu0 0.0
        %793 = vmatpush1.msra.mxu0 0.0
        %794 = vmatprep.subr.mxu0 0.0
        %795 = vmatpush1.msra.mxu0 0.0
        %796 = vmatprep.subr.mxu0 0.0
        %797 = vmatpush1.msra.mxu0 0.0
        %798 = vmatprep.subr.mxu0 0.0
        %799 = vmatpush1.msra.mxu0 0.0
        %800 = vmatprep.subr.mxu0 0.0
        %801 = vmatpush1.msra.mxu0 0.0
        %802 = vmatprep.subr.mxu0 0.0
        %803 = vmatpush1.msra.mxu0 0.0
        %804 = vmatprep.subr.mxu0 0.0
        %805 = vmatpush1.msra.mxu0 0.0
        %806 = vmatprep.mubr.f32.mxu0 0.0
        %807 = vmatmul.mubr.f32.gmra.mrb[0].mxu0 %v737
        %v808 = vpop.f32.mrb[0].mxu0
        %v809 = vadd.f32 %v728, %v808
        %v810 = vpop.f32.mrb[0].mxu0
        %v811 = vadd.f32 %v728, %v810
        %812 = vmatprep.mubr.f32.mxu0 0.0
        %813 = vmatmul.mubr.f32.gmra.mrb[0].mxu0 %v740
        %v814 = vpop.f32.mrb[0].mxu0
        %v815 = vadd.f32 %v733, %v814
        %v816 = vpop.f32.mrb[0].mxu0
        %v817 = vadd.f32 %v733, %v816
        %818 = vdwg.mxu0
        %v819 = vmax.f32 %v809, 0.0
        %v820 = vmax.f32 %v811, 0.0
        %v821 = vmax.f32 %v815, 0.0
        %v822 = vmax.f32 %v817, 0.0
        %s823 = scalar_lea.vmem %s5, 64
        %v824 = vld [vmem:[%s823] sm:$0xff]
        %v825 = vld [vmem:[%s823 + $0x8] sm:$0xff]
        %827 = vset.pattern.permute.xlu0 0
        %828 = vperm.xlu0 %827, %v824
        %v829 = vpop.permute.xlu0 %828
        %832 = vset.pattern.permute.xlu0 0
        %833 = vperm.xlu0 %832, %v825
        %v834 = vpop.permute.xlu0 %833
        %v836 = vmul.f32 %v829, %v819
        %v837 = vmul.f32 %v829, %v820
        %v838 = vmul.f32 %v834, %v821
        %v839 = vmul.f32 %v834, %v822
        %840 = vrot.lane.b32.xlu0 %v819, 17
        %v841 = vpop.permute.xlu0 %840
        %842 = vrot.lane.b32.xlu0 %v821, 17
        %v843 = vpop.permute.xlu0 %842
        %844 = vrot.lane.b32.xlu0 %v820, 17
        %v845 = vpop.permute.xlu0 %844
        %846 = vrot.lane.b32.xlu0 %v822, 17
        %v847 = vpop.permute.xlu0 %846
        %v848 = vsel %vm461, %v841, %v845
        %v849 = vsel %vm461, %v843, %v847
        %v850 = vsel %vm461, %v845, %v841
        %v851 = vsel %vm461, %v847, %v843
        %v852 = vld [vmem:[%s5] sm:$0xff]
        %v853 = vld [vmem:[%s5 + $0x8] sm:$0xff]
        %v854 = vmul.f32 %v470, %v850
        %v855 = vmul.f32 %v474, %v848
        %v856 = vmul.f32 %v470, %v851
        %v857 = vmul.f32 %v474, %v849
        %859 = vset.pattern.permute.xlu0 0
        %860 = vperm.xlu0 %859, %v852
        %v861 = vpop.permute.xlu0 %860
        %864 = vset.pattern.permute.xlu0 0
        %865 = vperm.xlu0 %864, %v853
        %v866 = vpop.permute.xlu0 %865
        %v868 = vmul.f32 %v861, %v854
        %v869 = vmul.f32 %v861, %v855
        %v870 = vmul.f32 %v866, %v856
        %v871 = vmul.f32 %v866, %v857
        %v872 = vadd.f32 %v836, %v868
        %v873 = vadd.f32 %v837, %v869
        %v874 = vadd.f32 %v838, %v870
        %v875 = vadd.f32 %v839, %v871
        %876 = vrot.lane.b32.xlu0 %v819, 16
        %v877 = vpop.permute.xlu0 %876
        %878 = vrot.lane.b32.xlu0 %v821, 16
        %v879 = vpop.permute.xlu0 %878
        %880 = vrot.lane.b32.xlu0 %v820, 16
        %v881 = vpop.permute.xlu0 %880
        %882 = vrot.lane.b32.xlu0 %v822, 16
        %v883 = vpop.permute.xlu0 %882
        %v884 = vsel %vm492, %v877, %v881
        %v885 = vsel %vm492, %v879, %v883
        %v886 = vsel %vm492, %v881, %v877
        %v887 = vsel %vm492, %v883, %v879
        %s888 = scalar_lea.vmem %s5, 16
        %v889 = vld [vmem:[%s888] sm:$0xff]
        %v890 = vld [vmem:[%s888 + $0x8] sm:$0xff]
        %v891 = vmul.f32 %v503, %v886
        %v892 = vmul.f32 %v507, %v884
        %v893 = vmul.f32 %v503, %v887
        %v894 = vmul.f32 %v507, %v885
        %896 = vset.pattern.permute.xlu0 0
        %897 = vperm.xlu0 %896, %v889
        %v898 = vpop.permute.xlu0 %897
        %901 = vset.pattern.permute.xlu0 0
        %902 = vperm.xlu0 %901, %v890
        %v903 = vpop.permute.xlu0 %902
        %v905 = vmul.f32 %v898, %v891
        %v906 = vmul.f32 %v898, %v892
        %v907 = vmul.f32 %v903, %v893
        %v908 = vmul.f32 %v903, %v894
        %v909 = vadd.f32 %v905, 0.0
        %v910 = vadd.f32 %v906, 0.0
        %v911 = vadd.f32 %v907, 0.0
        %v912 = vadd.f32 %v908, 0.0
        %913 = vrot.lane.b32.xlu0 %v819, 15
        %v914 = vpop.permute.xlu0 %913
        %915 = vrot.lane.b32.xlu0 %v821, 15
        %v916 = vpop.permute.xlu0 %915
        %917 = vrot.lane.b32.xlu0 %v820, 15
        %v918 = vpop.permute.xlu0 %917
        %919 = vrot.lane.b32.xlu0 %v822, 15
        %v920 = vpop.permute.xlu0 %919
        %v921 = vsel %vm525, %v914, %v918
        %v922 = vsel %vm525, %v916, %v920
        %v923 = vsel %vm525, %v918, %v914
        %v924 = vsel %vm525, %v920, %v916
        %s925 = scalar_lea.vmem %s5, 32
        %v926 = vld [vmem:[%s925] sm:$0xff]
        %v927 = vld [vmem:[%s925 + $0x8] sm:$0xff]
        %v928 = vmul.f32 %v536, %v923
        %v929 = vmul.f32 %v540, %v921
        %v930 = vmul.f32 %v536, %v924
        %v931 = vmul.f32 %v540, %v922
        %933 = vset.pattern.permute.xlu0 0
        %934 = vperm.xlu0 %933, %v926
        %v935 = vpop.permute.xlu0 %934
        %938 = vset.pattern.permute.xlu0 0
        %939 = vperm.xlu0 %938, %v927
        %v940 = vpop.permute.xlu0 %939
        %v942 = vmul.f32 %v935, %v928
        %v943 = vmul.f32 %v935, %v929
        %v944 = vmul.f32 %v940, %v930
        %v945 = vmul.f32 %v940, %v931
        %v946 = vadd.f32 %v872, %v942
        %v947 = vadd.f32 %v873, %v943
        %v948 = vadd.f32 %v874, %v944
        %v949 = vadd.f32 %v875, %v945
        %950 = vrot.lane.b32.xlu0 %v819, 1
        %v951 = vpop.permute.xlu0 %950
        %952 = vrot.lane.b32.xlu0 %v821, 1
        %v953 = vpop.permute.xlu0 %952
        %954 = vrot.lane.b32.xlu0 %v820, 1
        %v955 = vpop.permute.xlu0 %954
        %956 = vrot.lane.b32.xlu0 %v822, 1
        %v957 = vpop.permute.xlu0 %956
        %v958 = vsel %vm558, %v951, %v955
        %v959 = vsel %vm558, %v953, %v957
        %v960 = vsel %vm558, %v955, %v951
        %v961 = vsel %vm558, %v957, %v953
        %s962 = scalar_lea.vmem %s5, 48
        %v963 = vld [vmem:[%s962] sm:$0xff]
        %v964 = vld [vmem:[%s962 + $0x8] sm:$0xff]
        %v965 = vmul.f32 %v569, %v960
        %v966 = vmul.f32 %v573, %v958
        %v967 = vmul.f32 %v569, %v961
        %v968 = vmul.f32 %v573, %v959
        %970 = vset.pattern.permute.xlu0 0
        %971 = vperm.xlu0 %970, %v963
        %v972 = vpop.permute.xlu0 %971
        %975 = vset.pattern.permute.xlu0 0
        %976 = vperm.xlu0 %975, %v964
        %v977 = vpop.permute.xlu0 %976
        %v979 = vmul.f32 %v972, %v965
        %v980 = vmul.f32 %v972, %v966
        %v981 = vmul.f32 %v977, %v967
        %v982 = vmul.f32 %v977, %v968
        %v983 = vadd.f32 %v909, %v979
        %v984 = vadd.f32 %v910, %v980
        %v985 = vadd.f32 %v911, %v981
        %v986 = vadd.f32 %v912, %v982
        %987 = vrot.lane.b32.xlu0 %v819, 127
        %v988 = vpop.permute.xlu0 %987
        %989 = vrot.lane.b32.xlu0 %v821, 127
        %v990 = vpop.permute.xlu0 %989
        %991 = vrot.lane.b32.xlu0 %v820, 127
        %v992 = vpop.permute.xlu0 %991
        %993 = vrot.lane.b32.xlu0 %v822, 127
        %v994 = vpop.permute.xlu0 %993
        %v995 = vsel %vm591, %v988, %v992
        %v996 = vsel %vm591, %v990, %v994
        %v997 = vsel %vm591, %v992, %v988
        %v998 = vsel %vm591, %v994, %v990
        %s999 = scalar_lea.vmem %s5, 80
        %v1000 = vld [vmem:[%s999] sm:$0xff]
        %v1001 = vld [vmem:[%s999 + $0x8] sm:$0xff]
        %v1002 = vmul.f32 %v602, %v995
        %v1003 = vmul.f32 %v606, %v997
        %v1004 = vmul.f32 %v602, %v996
        %v1005 = vmul.f32 %v606, %v998
        %1007 = vset.pattern.permute.xlu0 0
        %1008 = vperm.xlu0 %1007, %v1000
        %v1009 = vpop.permute.xlu0 %1008
        %1012 = vset.pattern.permute.xlu0 0
        %1013 = vperm.xlu0 %1012, %v1001
        %v1014 = vpop.permute.xlu0 %1013
        %v1016 = vmul.f32 %v1009, %v1002
        %v1017 = vmul.f32 %v1009, %v1003
        %v1018 = vmul.f32 %v1014, %v1004
        %v1019 = vmul.f32 %v1014, %v1005
        %v1020 = vadd.f32 %v946, %v1016
        %v1021 = vadd.f32 %v947, %v1017
        %v1022 = vadd.f32 %v948, %v1018
        %v1023 = vadd.f32 %v949, %v1019
        %1024 = vrot.lane.b32.xlu0 %v819, 113
        %v1025 = vpop.permute.xlu0 %1024
        %1026 = vrot.lane.b32.xlu0 %v821, 113
        %v1027 = vpop.permute.xlu0 %1026
        %1028 = vrot.lane.b32.xlu0 %v820, 113
        %v1029 = vpop.permute.xlu0 %1028
        %1030 = vrot.lane.b32.xlu0 %v822, 113
        %v1031 = vpop.permute.xlu0 %1030
        %v1032 = vsel %vm624, %v1025, %v1029
        %v1033 = vsel %vm624, %v1027, %v1031
        %v1034 = vsel %vm624, %v1029, %v1025
        %v1035 = vsel %vm624, %v1031, %v1027
        %s1036 = scalar_lea.vmem %s5, 96
        %v1037 = vld [vmem:[%s1036] sm:$0xff]
        %v1038 = vld [vmem:[%s1036 + $0x8] sm:$0xff]
        %v1039 = vmul.f32 %v635, %v1032
        %v1040 = vmul.f32 %v639, %v1034
        %v1041 = vmul.f32 %v635, %v1033
        %v1042 = vmul.f32 %v639, %v1035
        %1044 = vset.pattern.permute.xlu0 0
        %1045 = vperm.xlu0 %1044, %v1037
        %v1046 = vpop.permute.xlu0 %1045
        %1049 = vset.pattern.permute.xlu0 0
        %1050 = vperm.xlu0 %1049, %v1038
        %v1051 = vpop.permute.xlu0 %1050
        %v1053 = vmul.f32 %v1046, %v1039
        %v1054 = vmul.f32 %v1046, %v1040
        %v1055 = vmul.f32 %v1051, %v1041
        %v1056 = vmul.f32 %v1051, %v1042
        %v1057 = vadd.f32 %v983, %v1053
        %v1058 = vadd.f32 %v984, %v1054
        %v1059 = vadd.f32 %v985, %v1055
        %v1060 = vadd.f32 %v986, %v1056
        %1061 = vrot.lane.b32.xlu0 %v819, 112
        %v1062 = vpop.permute.xlu0 %1061
        %1063 = vrot.lane.b32.xlu0 %v821, 112
        %v1064 = vpop.permute.xlu0 %1063
        %1065 = vrot.lane.b32.xlu0 %v820, 112
        %v1066 = vpop.permute.xlu0 %1065
        %1067 = vrot.lane.b32.xlu0 %v822, 112
        %v1068 = vpop.permute.xlu0 %1067
        %v1069 = vsel %vm657, %v1062, %v1066
        %v1070 = vsel %vm657, %v1064, %v1068
        %v1071 = vsel %vm657, %v1066, %v1062
        %v1072 = vsel %vm657, %v1068, %v1064
        %s1073 = scalar_lea.vmem %s5, 112
        %v1074 = vld [vmem:[%s1073] sm:$0xff]
        %v1075 = vld [vmem:[%s1073 + $0x8] sm:$0xff]
        %v1076 = vmul.f32 %v668, %v1069
        %v1077 = vmul.f32 %v672, %v1071
        %v1078 = vmul.f32 %v668, %v1070
        %v1079 = vmul.f32 %v672, %v1072
        %1081 = vset.pattern.permute.xlu0 0
        %1082 = vperm.xlu0 %1081, %v1074
        %v1083 = vpop.permute.xlu0 %1082
        %1086 = vset.pattern.permute.xlu0 0
        %1087 = vperm.xlu0 %1086, %v1075
        %v1088 = vpop.permute.xlu0 %1087
        %v1090 = vmul.f32 %v1083, %v1076
        %v1091 = vmul.f32 %v1083, %v1077
        %v1092 = vmul.f32 %v1088, %v1078
        %v1093 = vmul.f32 %v1088, %v1079
        %v1094 = vadd.f32 %v1020, %v1090
        %v1095 = vadd.f32 %v1021, %v1091
        %v1096 = vadd.f32 %v1022, %v1092
        %v1097 = vadd.f32 %v1023, %v1093
        %1098 = vrot.lane.b32.xlu0 %v819, 111
        %v1099 = vpop.permute.xlu0 %1098
        %1100 = vrot.lane.b32.xlu0 %v821, 111
        %v1101 = vpop.permute.xlu0 %1100
        %1102 = vrot.lane.b32.xlu0 %v820, 111
        %v1103 = vpop.permute.xlu0 %1102
        %1104 = vrot.lane.b32.xlu0 %v822, 111
        %v1105 = vpop.permute.xlu0 %1104
        %v1106 = vsel %vm690, %v1099, %v1103
        %v1107 = vsel %vm690, %v1101, %v1105
        %v1108 = vsel %vm690, %v1103, %v1099
        %v1109 = vsel %vm690, %v1105, %v1101
        %s1110 = scalar_lea.vmem %s5, 128
        %v1111 = vld [vmem:[%s1110] sm:$0xff]
        %v1112 = vld [vmem:[%s1110 + $0x8] sm:$0xff]
        %v1113 = vmul.f32 %v701, %v1106
        %v1114 = vmul.f32 %v705, %v1108
        %v1115 = vmul.f32 %v701, %v1107
        %v1116 = vmul.f32 %v705, %v1109
        %1118 = vset.pattern.permute.xlu0 0
        %1119 = vperm.xlu0 %1118, %v1111
        %v1120 = vpop.permute.xlu0 %1119
        %1123 = vset.pattern.permute.xlu0 0
        %1124 = vperm.xlu0 %1123, %v1112
        %v1125 = vpop.permute.xlu0 %1124
        %v1127 = vmul.f32 %v1120, %v1113
        %v1128 = vmul.f32 %v1120, %v1114
        %v1129 = vmul.f32 %v1125, %v1115
        %v1130 = vmul.f32 %v1125, %v1116
        %v1131 = vadd.f32 %v1057, %v1127
        %v1132 = vadd.f32 %v1058, %v1128
        %v1133 = vadd.f32 %v1059, %v1129
        %v1134 = vadd.f32 %v1060, %v1130
        %v1135 = vadd.f32 %v1094, %v1131
        %v1136 = vadd.f32 %v1095, %v1132
        %v1137 = vadd.f32 %v1096, %v1133
        %v1138 = vadd.f32 %v1097, %v1134
        %v1139 = vld [vmem:[%s6] sm:$0xff]
        %v1140 = vld [vmem:[%s6 + $0x8] sm:$0xff]
        %v1141 = vld [vmem:[%s7] sm:$0xff]
        %v1142 = vld [vmem:[%s7 + $0x8] sm:$0xff]
        %1144 = vset.pattern.permute.xlu0 0
        %1145 = vperm.xlu0 %1144, %v1141
        %v1146 = vpop.permute.xlu0 %1145
        %1149 = vset.pattern.permute.xlu0 0
        %1150 = vperm.xlu0 %1149, %v1142
        %v1151 = vpop.permute.xlu0 %1150
        %vm1153 = vcmask 130048
        %v1155 = vsel %vm1153, %v1139, 0
        %v1158 = vsel %vm1153, %v1140, 0
        %1160 = vmatprep.subr.mxu0 %v1136
        %1161 = vmatpush1.msra.mxu0 %v1135
        %1162 = vmatprep.subr.mxu0 %v1138
        %1163 = vmatpush1.msra.mxu0 %v1137
        %1164 = vmatprep.subr.mxu0 0.0
        %1165 = vmatpush1.msra.mxu0 0.0
        %1166 = vmatprep.subr.mxu0 0.0
        %1167 = vmatpush1.msra.mxu0 0.0
        %1168 = vmatprep.subr.mxu0 0.0
        %1169 = vmatpush1.msra.mxu0 0.0
        %1170 = vmatprep.subr.mxu0 0.0
        %1171 = vmatpush1.msra.mxu0 0.0
        %1172 = vmatprep.subr.mxu0 0.0
        %1173 = vmatpush1.msra.mxu0 0.0
        %1174 = vmatprep.subr.mxu0 0.0
        %1175 = vmatpush1.msra.mxu0 0.0
        %1176 = vmatprep.subr.mxu0 0.0
        %1177 = vmatpush1.msra.mxu0 0.0
        %1178 = vmatprep.subr.mxu0 0.0
        %1179 = vmatpush1.msra.mxu0 0.0
        %1180 = vmatprep.subr.mxu0 0.0
        %1181 = vmatpush1.msra.mxu0 0.0
        %1182 = vmatprep.subr.mxu0 0.0
        %1183 = vmatpush1.msra.mxu0 0.0
        %1184 = vmatprep.subr.mxu0 0.0
        %1185 = vmatpush1.msra.mxu0 0.0
        %1186 = vmatprep.subr.mxu0 0.0
        %1187 = vmatpush1.msra.mxu0 0.0
        %1188 = vmatprep.subr.mxu0 0.0
        %1189 = vmatpush1.msra.mxu0 0.0
        %1190 = vmatprep.subr.mxu0 0.0
        %1191 = vmatpush1.msra.mxu0 0.0
        %1192 = vmatprep.subr.mxu0 0.0
        %1193 = vmatpush1.msra.mxu0 0.0
        %1194 = vmatprep.subr.mxu0 0.0
        %1195 = vmatpush1.msra.mxu0 0.0
        %1196 = vmatprep.subr.mxu0 0.0
        %1197 = vmatpush1.msra.mxu0 0.0
        %1198 = vmatprep.subr.mxu0 0.0
        %1199 = vmatpush1.msra.mxu0 0.0
        %1200 = vmatprep.subr.mxu0 0.0
        %1201 = vmatpush1.msra.mxu0 0.0
        %1202 = vmatprep.subr.mxu0 0.0
        %1203 = vmatpush1.msra.mxu0 0.0
        %1204 = vmatprep.subr.mxu0 0.0
        %1205 = vmatpush1.msra.mxu0 0.0
        %1206 = vmatprep.subr.mxu0 0.0
        %1207 = vmatpush1.msra.mxu0 0.0
        %1208 = vmatprep.subr.mxu0 0.0
        %1209 = vmatpush1.msra.mxu0 0.0
        %1210 = vmatprep.subr.mxu0 0.0
        %1211 = vmatpush1.msra.mxu0 0.0
        %1212 = vmatprep.subr.mxu0 0.0
        %1213 = vmatpush1.msra.mxu0 0.0
        %1214 = vmatprep.subr.mxu0 0.0
        %1215 = vmatpush1.msra.mxu0 0.0
        %1216 = vmatprep.subr.mxu0 0.0
        %1217 = vmatpush1.msra.mxu0 0.0
        %1218 = vmatprep.subr.mxu0 0.0
        %1219 = vmatpush1.msra.mxu0 0.0
        %1220 = vmatprep.subr.mxu0 0.0
        %1221 = vmatpush1.msra.mxu0 0.0
        %1222 = vmatprep.subr.mxu0 0.0
        %1223 = vmatpush1.msra.mxu0 0.0
        %1224 = vmatprep.mubr.f32.mxu0 0.0
        %1225 = vmatmul.mubr.f32.gmra.mrb[0].mxu0 %v1155
        %v1226 = vpop.f32.mrb[0].mxu0
        %v1227 = vadd.f32 %v1146, %v1226
        %v1228 = vpop.f32.mrb[0].mxu0
        %v1229 = vadd.f32 %v1146, %v1228
        %1230 = vmatprep.mubr.f32.mxu0 0.0
        %1231 = vmatmul.mubr.f32.gmra.mrb[0].mxu0 %v1158
        %v1232 = vpop.f32.mrb[0].mxu0
        %v1233 = vadd.f32 %v1151, %v1232
        %v1234 = vpop.f32.mrb[0].mxu0
        %v1235 = vadd.f32 %v1151, %v1234
        %1236 = vdwg.mxu0
        %v1237 = vmax.f32 %v1227, 0.0
        %v1238 = vmax.f32 %v1229, 0.0
        %v1239 = vmax.f32 %v1233, 0.0
        %v1240 = vmax.f32 %v1235, 0.0
        %s1241 = scalar_lea.vmem %s8, 64
        %v1242 = vld [vmem:[%s1241] sm:$0xff]
        %v1243 = vld [vmem:[%s1241 + $0x8] sm:$0xff]
        %1245 = vset.pattern.permute.xlu0 0
        %1246 = vperm.xlu0 %1245, %v1242
        %v1247 = vpop.permute.xlu0 %1246
        %1250 = vset.pattern.permute.xlu0 0
        %1251 = vperm.xlu0 %1250, %v1243
        %v1252 = vpop.permute.xlu0 %1251
        %v1254 = vmul.f32 %v1247, %v1237
        %v1255 = vmul.f32 %v1247, %v1238
        %v1256 = vmul.f32 %v1252, %v1239
        %v1257 = vmul.f32 %v1252, %v1240
        %1258 = vrot.lane.b32.xlu0 %v1237, 17
        %v1259 = vpop.permute.xlu0 %1258
        %1260 = vrot.lane.b32.xlu0 %v1239, 17
        %v1261 = vpop.permute.xlu0 %1260
        %1262 = vrot.lane.b32.xlu0 %v1238, 17
        %v1263 = vpop.permute.xlu0 %1262
        %1264 = vrot.lane.b32.xlu0 %v1240, 17
        %v1265 = vpop.permute.xlu0 %1264
        %v1266 = vsel %vm461, %v1259, %v1263
        %v1267 = vsel %vm461, %v1261, %v1265
        %v1268 = vsel %vm461, %v1263, %v1259
        %v1269 = vsel %vm461, %v1265, %v1261
        %v1270 = vld [vmem:[%s8] sm:$0xff]
        %v1271 = vld [vmem:[%s8 + $0x8] sm:$0xff]
        %v1272 = vmul.f32 %v470, %v1268
        %v1273 = vmul.f32 %v474, %v1266
        %v1274 = vmul.f32 %v470, %v1269
        %v1275 = vmul.f32 %v474, %v1267
        %1277 = vset.pattern.permute.xlu0 0
        %1278 = vperm.xlu0 %1277, %v1270
        %v1279 = vpop.permute.xlu0 %1278
        %1282 = vset.pattern.permute.xlu0 0
        %1283 = vperm.xlu0 %1282, %v1271
        %v1284 = vpop.permute.xlu0 %1283
        %v1286 = vmul.f32 %v1279, %v1272
        %v1287 = vmul.f32 %v1279, %v1273
        %v1288 = vmul.f32 %v1284, %v1274
        %v1289 = vmul.f32 %v1284, %v1275
        %v1290 = vadd.f32 %v1254, %v1286
        %v1291 = vadd.f32 %v1255, %v1287
        %v1292 = vadd.f32 %v1256, %v1288
        %v1293 = vadd.f32 %v1257, %v1289
        %1294 = vrot.lane.b32.xlu0 %v1237, 16
        %v1295 = vpop.permute.xlu0 %1294
        %1296 = vrot.lane.b32.xlu0 %v1239, 16
        %v1297 = vpop.permute.xlu0 %1296
        %1298 = vrot.lane.b32.xlu0 %v1238, 16
        %v1299 = vpop.permute.xlu0 %1298
        %1300 = vrot.lane.b32.xlu0 %v1240, 16
        %v1301 = vpop.permute.xlu0 %1300
        %v1302 = vsel %vm492, %v1295, %v1299
        %v1303 = vsel %vm492, %v1297, %v1301
        %v1304 = vsel %vm492, %v1299, %v1295
        %v1305 = vsel %vm492, %v1301, %v1297
        %s1306 = scalar_lea.vmem %s8, 16
        %v1307 = vld [vmem:[%s1306] sm:$0xff]
        %v1308 = vld [vmem:[%s1306 + $0x8] sm:$0xff]
        %v1309 = vmul.f32 %v503, %v1304
        %v1310 = vmul.f32 %v507, %v1302
        %v1311 = vmul.f32 %v503, %v1305
        %v1312 = vmul.f32 %v507, %v1303
        %1314 = vset.pattern.permute.xlu0 0
        %1315 = vperm.xlu0 %1314, %v1307
        %v1316 = vpop.permute.xlu0 %1315
        %1319 = vset.pattern.permute.xlu0 0
        %1320 = vperm.xlu0 %1319, %v1308
        %v1321 = vpop.permute.xlu0 %1320
        %v1323 = vmul.f32 %v1316, %v1309
        %v1324 = vmul.f32 %v1316, %v1310
        %v1325 = vmul.f32 %v1321, %v1311
        %v1326 = vmul.f32 %v1321, %v1312
        %v1327 = vadd.f32 %v1323, 0.0
        %v1328 = vadd.f32 %v1324, 0.0
        %v1329 = vadd.f32 %v1325, 0.0
        %v1330 = vadd.f32 %v1326, 0.0
        %1331 = vrot.lane.b32.xlu0 %v1237, 15
        %v1332 = vpop.permute.xlu0 %1331
        %1333 = vrot.lane.b32.xlu0 %v1239, 15
        %v1334 = vpop.permute.xlu0 %1333
        %1335 = vrot.lane.b32.xlu0 %v1238, 15
        %v1336 = vpop.permute.xlu0 %1335
        %1337 = vrot.lane.b32.xlu0 %v1240, 15
        %v1338 = vpop.permute.xlu0 %1337
        %v1339 = vsel %vm525, %v1332, %v1336
        %v1340 = vsel %vm525, %v1334, %v1338
        %v1341 = vsel %vm525, %v1336, %v1332
        %v1342 = vsel %vm525, %v1338, %v1334
        %s1343 = scalar_lea.vmem %s8, 32
        %v1344 = vld [vmem:[%s1343] sm:$0xff]
        %v1345 = vld [vmem:[%s1343 + $0x8] sm:$0xff]
        %v1346 = vmul.f32 %v536, %v1341
        %v1347 = vmul.f32 %v540, %v1339
        %v1348 = vmul.f32 %v536, %v1342
        %v1349 = vmul.f32 %v540, %v1340
        %1351 = vset.pattern.permute.xlu0 0
        %1352 = vperm.xlu0 %1351, %v1344
        %v1353 = vpop.permute.xlu0 %1352
        %1356 = vset.pattern.permute.xlu0 0
        %1357 = vperm.xlu0 %1356, %v1345
        %v1358 = vpop.permute.xlu0 %1357
        %v1360 = vmul.f32 %v1353, %v1346
        %v1361 = vmul.f32 %v1353, %v1347
        %v1362 = vmul.f32 %v1358, %v1348
        %v1363 = vmul.f32 %v1358, %v1349
        %v1364 = vadd.f32 %v1290, %v1360
        %v1365 = vadd.f32 %v1291, %v1361
        %v1366 = vadd.f32 %v1292, %v1362
        %v1367 = vadd.f32 %v1293, %v1363
        %1368 = vrot.lane.b32.xlu0 %v1237, 1
        %v1369 = vpop.permute.xlu0 %1368
        %1370 = vrot.lane.b32.xlu0 %v1239, 1
        %v1371 = vpop.permute.xlu0 %1370
        %1372 = vrot.lane.b32.xlu0 %v1238, 1
        %v1373 = vpop.permute.xlu0 %1372
        %1374 = vrot.lane.b32.xlu0 %v1240, 1
        %v1375 = vpop.permute.xlu0 %1374
        %v1376 = vsel %vm558, %v1369, %v1373
        %v1377 = vsel %vm558, %v1371, %v1375
        %v1378 = vsel %vm558, %v1373, %v1369
        %v1379 = vsel %vm558, %v1375, %v1371
        %s1380 = scalar_lea.vmem %s8, 48
        %v1381 = vld [vmem:[%s1380] sm:$0xff]
        %v1382 = vld [vmem:[%s1380 + $0x8] sm:$0xff]
        %v1383 = vmul.f32 %v569, %v1378
        %v1384 = vmul.f32 %v573, %v1376
        %v1385 = vmul.f32 %v569, %v1379
        %v1386 = vmul.f32 %v573, %v1377
        %1388 = vset.pattern.permute.xlu0 0
        %1389 = vperm.xlu0 %1388, %v1381
        %v1390 = vpop.permute.xlu0 %1389
        %1393 = vset.pattern.permute.xlu0 0
        %1394 = vperm.xlu0 %1393, %v1382
        %v1395 = vpop.permute.xlu0 %1394
        %v1397 = vmul.f32 %v1390, %v1383
        %v1398 = vmul.f32 %v1390, %v1384
        %v1399 = vmul.f32 %v1395, %v1385
        %v1400 = vmul.f32 %v1395, %v1386
        %v1401 = vadd.f32 %v1327, %v1397
        %v1402 = vadd.f32 %v1328, %v1398
        %v1403 = vadd.f32 %v1329, %v1399
        %v1404 = vadd.f32 %v1330, %v1400
        %1405 = vrot.lane.b32.xlu0 %v1237, 127
        %v1406 = vpop.permute.xlu0 %1405
        %1407 = vrot.lane.b32.xlu0 %v1239, 127
        %v1408 = vpop.permute.xlu0 %1407
        %1409 = vrot.lane.b32.xlu0 %v1238, 127
        %v1410 = vpop.permute.xlu0 %1409
        %1411 = vrot.lane.b32.xlu0 %v1240, 127
        %v1412 = vpop.permute.xlu0 %1411
        %v1413 = vsel %vm591, %v1406, %v1410
        %v1414 = vsel %vm591, %v1408, %v1412
        %v1415 = vsel %vm591, %v1410, %v1406
        %v1416 = vsel %vm591, %v1412, %v1408
        %s1417 = scalar_lea.vmem %s8, 80
        %v1418 = vld [vmem:[%s1417] sm:$0xff]
        %v1419 = vld [vmem:[%s1417 + $0x8] sm:$0xff]
        %v1420 = vmul.f32 %v602, %v1413
        %v1421 = vmul.f32 %v606, %v1415
        %v1422 = vmul.f32 %v602, %v1414
        %v1423 = vmul.f32 %v606, %v1416
        %1425 = vset.pattern.permute.xlu0 0
        %1426 = vperm.xlu0 %1425, %v1418
        %v1427 = vpop.permute.xlu0 %1426
        %1430 = vset.pattern.permute.xlu0 0
        %1431 = vperm.xlu0 %1430, %v1419
        %v1432 = vpop.permute.xlu0 %1431
        %v1434 = vmul.f32 %v1427, %v1420
        %v1435 = vmul.f32 %v1427, %v1421
        %v1436 = vmul.f32 %v1432, %v1422
        %v1437 = vmul.f32 %v1432, %v1423
        %v1438 = vadd.f32 %v1364, %v1434
        %v1439 = vadd.f32 %v1365, %v1435
        %v1440 = vadd.f32 %v1366, %v1436
        %v1441 = vadd.f32 %v1367, %v1437
        %1442 = vrot.lane.b32.xlu0 %v1237, 113
        %v1443 = vpop.permute.xlu0 %1442
        %1444 = vrot.lane.b32.xlu0 %v1239, 113
        %v1445 = vpop.permute.xlu0 %1444
        %1446 = vrot.lane.b32.xlu0 %v1238, 113
        %v1447 = vpop.permute.xlu0 %1446
        %1448 = vrot.lane.b32.xlu0 %v1240, 113
        %v1449 = vpop.permute.xlu0 %1448
        %v1450 = vsel %vm624, %v1443, %v1447
        %v1451 = vsel %vm624, %v1445, %v1449
        %v1452 = vsel %vm624, %v1447, %v1443
        %v1453 = vsel %vm624, %v1449, %v1445
        %s1454 = scalar_lea.vmem %s8, 96
        %v1455 = vld [vmem:[%s1454] sm:$0xff]
        %v1456 = vld [vmem:[%s1454 + $0x8] sm:$0xff]
        %v1457 = vmul.f32 %v635, %v1450
        %v1458 = vmul.f32 %v639, %v1452
        %v1459 = vmul.f32 %v635, %v1451
        %v1460 = vmul.f32 %v639, %v1453
        %1462 = vset.pattern.permute.xlu0 0
        %1463 = vperm.xlu0 %1462, %v1455
        %v1464 = vpop.permute.xlu0 %1463
        %1467 = vset.pattern.permute.xlu0 0
        %1468 = vperm.xlu0 %1467, %v1456
        %v1469 = vpop.permute.xlu0 %1468
        %v1471 = vmul.f32 %v1464, %v1457
        %v1472 = vmul.f32 %v1464, %v1458
        %v1473 = vmul.f32 %v1469, %v1459
        %v1474 = vmul.f32 %v1469, %v1460
        %v1475 = vadd.f32 %v1401, %v1471
        %v1476 = vadd.f32 %v1402, %v1472
        %v1477 = vadd.f32 %v1403, %v1473
        %v1478 = vadd.f32 %v1404, %v1474
        %1479 = vrot.lane.b32.xlu0 %v1237, 112
        %v1480 = vpop.permute.xlu0 %1479
        %1481 = vrot.lane.b32.xlu0 %v1239, 112
        %v1482 = vpop.permute.xlu0 %1481
        %1483 = vrot.lane.b32.xlu0 %v1238, 112
        %v1484 = vpop.permute.xlu0 %1483
        %1485 = vrot.lane.b32.xlu0 %v1240, 112
        %v1486 = vpop.permute.xlu0 %1485
        %v1487 = vsel %vm657, %v1480, %v1484
        %v1488 = vsel %vm657, %v1482, %v1486
        %v1489 = vsel %vm657, %v1484, %v1480
        %v1490 = vsel %vm657, %v1486, %v1482
        %s1491 = scalar_lea.vmem %s8, 112
        %v1492 = vld [vmem:[%s1491] sm:$0xff]
        %v1493 = vld [vmem:[%s1491 + $0x8] sm:$0xff]
        %v1494 = vmul.f32 %v668, %v1487
        %v1495 = vmul.f32 %v672, %v1489
        %v1496 = vmul.f32 %v668, %v1488
        %v1497 = vmul.f32 %v672, %v1490
        %1499 = vset.pattern.permute.xlu0 0
        %1500 = vperm.xlu0 %1499, %v1492
        %v1501 = vpop.permute.xlu0 %1500
        %1504 = vset.pattern.permute.xlu0 0
        %1505 = vperm.xlu0 %1504, %v1493
        %v1506 = vpop.permute.xlu0 %1505
        %v1508 = vmul.f32 %v1501, %v1494
        %v1509 = vmul.f32 %v1501, %v1495
        %v1510 = vmul.f32 %v1506, %v1496
        %v1511 = vmul.f32 %v1506, %v1497
        %v1512 = vadd.f32 %v1438, %v1508
        %v1513 = vadd.f32 %v1439, %v1509
        %v1514 = vadd.f32 %v1440, %v1510
        %v1515 = vadd.f32 %v1441, %v1511
        %1516 = vrot.lane.b32.xlu0 %v1237, 111
        %v1517 = vpop.permute.xlu0 %1516
        %1518 = vrot.lane.b32.xlu0 %v1239, 111
        %v1519 = vpop.permute.xlu0 %1518
        %1520 = vrot.lane.b32.xlu0 %v1238, 111
        %v1521 = vpop.permute.xlu0 %1520
        %1522 = vrot.lane.b32.xlu0 %v1240, 111
        %v1523 = vpop.permute.xlu0 %1522
        %v1524 = vsel %vm690, %v1517, %v1521
        %v1525 = vsel %vm690, %v1519, %v1523
        %v1526 = vsel %vm690, %v1521, %v1517
        %v1527 = vsel %vm690, %v1523, %v1519
        %s1528 = scalar_lea.vmem %s8, 128
        %v1529 = vld [vmem:[%s1528] sm:$0xff]
        %v1530 = vld [vmem:[%s1528 + $0x8] sm:$0xff]
        %v1531 = vmul.f32 %v701, %v1524
        %v1532 = vmul.f32 %v705, %v1526
        %v1533 = vmul.f32 %v701, %v1525
        %v1534 = vmul.f32 %v705, %v1527
        %1536 = vset.pattern.permute.xlu0 0
        %1537 = vperm.xlu0 %1536, %v1529
        %v1538 = vpop.permute.xlu0 %1537
        %1541 = vset.pattern.permute.xlu0 0
        %1542 = vperm.xlu0 %1541, %v1530
        %v1543 = vpop.permute.xlu0 %1542
        %v1545 = vmul.f32 %v1538, %v1531
        %v1546 = vmul.f32 %v1538, %v1532
        %v1547 = vmul.f32 %v1543, %v1533
        %v1548 = vmul.f32 %v1543, %v1534
        %v1549 = vadd.f32 %v1475, %v1545
        %v1550 = vadd.f32 %v1476, %v1546
        %v1551 = vadd.f32 %v1477, %v1547
        %v1552 = vadd.f32 %v1478, %v1548
        %v1553 = vadd.f32 %v1512, %v1549
        %v1554 = vadd.f32 %v1513, %v1550
        %v1555 = vadd.f32 %v1514, %v1551
        %v1556 = vadd.f32 %v1515, %v1552
        %v1557 = vld [vmem:[%s9] sm:$0xff]
        %v1558 = vld [vmem:[%s9 + $0x8] sm:$0xff]
        %v1559 = vld [vmem:[%s10] sm:$0xff]
        %v1560 = vld [vmem:[%s10 + $0x8] sm:$0xff]
        %1562 = vset.pattern.permute.xlu0 0
        %1563 = vperm.xlu0 %1562, %v1559
        %v1564 = vpop.permute.xlu0 %1563
        %1567 = vset.pattern.permute.xlu0 0
        %1568 = vperm.xlu0 %1567, %v1560
        %v1569 = vpop.permute.xlu0 %1568
        %v1572 = vsel %vm1153, %v1557, 0
        %v1575 = vsel %vm1153, %v1558, 0
        %1577 = vmatprep.subr.mxu0 %v1554
        %1578 = vmatpush1.msra.mxu0 %v1553
        %1579 = vmatprep.subr.mxu0 %v1556
        %1580 = vmatpush1.msra.mxu0 %v1555
        %1581 = vmatprep.subr.mxu0 0.0
        %1582 = vmatpush1.msra.mxu0 0.0
        %1583 = vmatprep.subr.mxu0 0.0
        %1584 = vmatpush1.msra.mxu0 0.0
        %1585 = vmatprep.subr.mxu0 0.0
        %1586 = vmatpush1.msra.mxu0 0.0
        %1587 = vmatprep.subr.mxu0 0.0
        %1588 = vmatpush1.msra.mxu0 0.0
        %1589 = vmatprep.subr.mxu0 0.0
        %1590 = vmatpush1.msra.mxu0 0.0
        %1591 = vmatprep.subr.mxu0 0.0
        %1592 = vmatpush1.msra.mxu0 0.0
        %1593 = vmatprep.subr.mxu0 0.0
        %1594 = vmatpush1.msra.mxu0 0.0
        %1595 = vmatprep.subr.mxu0 0.0
        %1596 = vmatpush1.msra.mxu0 0.0
        %1597 = vmatprep.subr.mxu0 0.0
        %1598 = vmatpush1.msra.mxu0 0.0
        %1599 = vmatprep.subr.mxu0 0.0
        %1600 = vmatpush1.msra.mxu0 0.0
        %1601 = vmatprep.subr.mxu0 0.0
        %1602 = vmatpush1.msra.mxu0 0.0
        %1603 = vmatprep.subr.mxu0 0.0
        %1604 = vmatpush1.msra.mxu0 0.0
        %1605 = vmatprep.subr.mxu0 0.0
        %1606 = vmatpush1.msra.mxu0 0.0
        %1607 = vmatprep.subr.mxu0 0.0
        %1608 = vmatpush1.msra.mxu0 0.0
        %1609 = vmatprep.subr.mxu0 0.0
        %1610 = vmatpush1.msra.mxu0 0.0
        %1611 = vmatprep.subr.mxu0 0.0
        %1612 = vmatpush1.msra.mxu0 0.0
        %1613 = vmatprep.subr.mxu0 0.0
        %1614 = vmatpush1.msra.mxu0 0.0
        %1615 = vmatprep.subr.mxu0 0.0
        %1616 = vmatpush1.msra.mxu0 0.0
        %1617 = vmatprep.subr.mxu0 0.0
        %1618 = vmatpush1.msra.mxu0 0.0
        %1619 = vmatprep.subr.mxu0 0.0
        %1620 = vmatpush1.msra.mxu0 0.0
        %1621 = vmatprep.subr.mxu0 0.0
        %1622 = vmatpush1.msra.mxu0 0.0
        %1623 = vmatprep.subr.mxu0 0.0
        %1624 = vmatpush1.msra.mxu0 0.0
        %1625 = vmatprep.subr.mxu0 0.0
        %1626 = vmatpush1.msra.mxu0 0.0
        %1627 = vmatprep.subr.mxu0 0.0
        %1628 = vmatpush1.msra.mxu0 0.0
        %1629 = vmatprep.subr.mxu0 0.0
        %1630 = vmatpush1.msra.mxu0 0.0
        %1631 = vmatprep.subr.mxu0 0.0
        %1632 = vmatpush1.msra.mxu0 0.0
        %1633 = vmatprep.subr.mxu0 0.0
        %1634 = vmatpush1.msra.mxu0 0.0
        %1635 = vmatprep.subr.mxu0 0.0
        %1636 = vmatpush1.msra.mxu0 0.0
        %1637 = vmatprep.subr.mxu0 0.0
        %1638 = vmatpush1.msra.mxu0 0.0
        %1639 = vmatprep.subr.mxu0 0.0
        %1640 = vmatpush1.msra.mxu0 0.0
        %1641 = vmatprep.mubr.f32.mxu0 0.0
        %1642 = vmatmul.mubr.f32.gmra.mrb[0].mxu0 %v1572
        %v1643 = vpop.f32.mrb[0].mxu0
        %v1644 = vadd.f32 %v1564, %v1643
        %v1645 = vpop.f32.mrb[0].mxu0
        %v1646 = vadd.f32 %v1564, %v1645
        %1647 = vmatprep.mubr.f32.mxu0 0.0
        %1648 = vmatmul.mubr.f32.gmra.mrb[0].mxu0 %v1575
        %v1649 = vpop.f32.mrb[0].mxu0
        %v1650 = vadd.f32 %v1569, %v1649
        %v1651 = vpop.f32.mrb[0].mxu0
        %v1652 = vadd.f32 %v1569, %v1651
        %1653 = vdwg.mxu0
        %v1654 = vld [vmem:[%s11] sm:$0xff]
        %v1655 = vld [vmem:[%s11 + $0x8] sm:$0xff]
        %v1656 = vld [vmem:[%s12] sm:$0xff]
        %v1657 = vld [vmem:[%s12 + $0x8] sm:$0xff]
        %1659 = vset.pattern.permute.xlu0 0
        %1660 = vperm.xlu0 %1659, %v1656
        %v1661 = vpop.permute.xlu0 %1660
        %1664 = vset.pattern.permute.xlu0 0
        %1665 = vperm.xlu0 %1664, %v1657
        %v1666 = vpop.permute.xlu0 %1665
        %v1669 = vsel %vm735, %v1654, 0
        %v1672 = vsel %vm735, %v1655, 0
        %1674 = vmatprep.subr.mxu0 %v443
        %1675 = vmatpush1.msra.mxu0 %v442
        %1676 = vmatprep.subr.mxu0 0.0
        %1677 = vmatpush1.msra.mxu0 0.0
        %1678 = vmatprep.subr.mxu0 0.0
        %1679 = vmatpush1.msra.mxu0 0.0
        %1680 = vmatprep.subr.mxu0 0.0
        %1681 = vmatpush1.msra.mxu0 0.0
        %1682 = vmatprep.subr.mxu0 0.0
        %1683 = vmatpush1.msra.mxu0 0.0
        %1684 = vmatprep.subr.mxu0 0.0
        %1685 = vmatpush1.msra.mxu0 0.0
        %1686 = vmatprep.subr.mxu0 0.0
        %1687 = vmatpush1.msra.mxu0 0.0
        %1688 = vmatprep.subr.mxu0 0.0
        %1689 = vmatpush1.msra.mxu0 0.0
        %1690 = vmatprep.subr.mxu0 0.0
        %1691 = vmatpush1.msra.mxu0 0.0
        %1692 = vmatprep.subr.mxu0 0.0
        %1693 = vmatpush1.msra.mxu0 0.0
        %1694 = vmatprep.subr.mxu0 0.0
        %1695 = vmatpush1.msra.mxu0 0.0
        %1696 = vmatprep.subr.mxu0 0.0
        %1697 = vmatpush1.msra.mxu0 0.0
        %1698 = vmatprep.subr.mxu0 0.0
        %1699 = vmatpush1.msra.mxu0 0.0
        %1700 = vmatprep.subr.mxu0 0.0
        %1701 = vmatpush1.msra.mxu0 0.0
        %1702 = vmatprep.subr.mxu0 0.0
        %1703 = vmatpush1.msra.mxu0 0.0
        %1704 = vmatprep.subr.mxu0 0.0
        %1705 = vmatpush1.msra.mxu0 0.0
        %1706 = vmatprep.subr.mxu0 0.0
        %1707 = vmatpush1.msra.mxu0 0.0
        %1708 = vmatprep.subr.mxu0 0.0
        %1709 = vmatpush1.msra.mxu0 0.0
        %1710 = vmatprep.subr.mxu0 0.0
        %1711 = vmatpush1.msra.mxu0 0.0
        %1712 = vmatprep.subr.mxu0 0.0
        %1713 = vmatpush1.msra.mxu0 0.0
        %1714 = vmatprep.subr.mxu0 0.0
        %1715 = vmatpush1.msra.mxu0 0.0
        %1716 = vmatprep.subr.mxu0 0.0
        %1717 = vmatpush1.msra.mxu0 0.0
        %1718 = vmatprep.subr.mxu0 0.0
        %1719 = vmatpush1.msra.mxu0 0.0
        %1720 = vmatprep.subr.mxu0 0.0
        %1721 = vmatpush1.msra.mxu0 0.0
        %1722 = vmatprep.subr.mxu0 0.0
        %1723 = vmatpush1.msra.mxu0 0.0
        %1724 = vmatprep.subr.mxu0 0.0
        %1725 = vmatpush1.msra.mxu0 0.0
        %1726 = vmatprep.subr.mxu0 0.0
        %1727 = vmatpush1.msra.mxu0 0.0
        %1728 = vmatprep.subr.mxu0 0.0
        %1729 = vmatpush1.msra.mxu0 0.0
        %1730 = vmatprep.subr.mxu0 0.0
        %1731 = vmatpush1.msra.mxu0 0.0
        %1732 = vmatprep.subr.mxu0 0.0
        %1733 = vmatpush1.msra.mxu0 0.0
        %1734 = vmatprep.subr.mxu0 0.0
        %1735 = vmatpush1.msra.mxu0 0.0
        %1736 = vmatprep.subr.mxu0 0.0
        %1737 = vmatpush1.msra.mxu0 0.0
        %1738 = vmatprep.mubr.f32.mxu0 0.0
        %1739 = vmatmul.mubr.f32.gmra.mrb[0].mxu0 %v1669
        %v1740 = vpop.f32.mrb[0].mxu0
        %v1741 = vadd.f32 %v1661, %v1740
        %v1742 = vpop.f32.mrb[0].mxu0
        %v1743 = vadd.f32 %v1661, %v1742
        %1744 = vmatprep.mubr.f32.mxu0 0.0
        %1745 = vmatmul.mubr.f32.gmra.mrb[0].mxu0 %v1672
        %v1746 = vpop.f32.mrb[0].mxu0
        %v1747 = vadd.f32 %v1666, %v1746
        %v1748 = vpop.f32.mrb[0].mxu0
        %v1749 = vadd.f32 %v1666, %v1748
        %1750 = vdwg.mxu0
        %v1751 = vadd.f32 %v1644, %v1741
        %v1752 = vadd.f32 %v1646, %v1743
        %v1753 = vadd.f32 %v1650, %v1747
        %v1754 = vadd.f32 %v1652, %v1749
        %1755 = vst [vmem:[%s434] sm:$0xff] %v1751
        %1756 = vst [vmem:[%s434 + $0x8] sm:$0xff] %v1752
        %1757 = vst [vmem:[%s434 + $0x10] sm:$0xff] %v1753
        %1758 = vst [vmem:[%s434 + $0x18] sm:$0xff] %v1754
        %s1759 = sand.u32 %s313, 1
        %s1760 = scalar_lea.sflag [#allocation3], %s1759
        %s1761 = sand.u32 %s313, 1
        %s1762 = smul.addr %s1761, 32
        %s1763 = scalar_lea.vmem [#allocation2], %s1762
        // Predicated region
        $region73: #{tpu_custom_call.1} parent=71 // pred_check
          %p1764 = pneg %p323
        $region74: #{tpu_custom_call.1} parent=71 // pred_check_branch
          %1766 = sbr.rel (%p1764) target = $region76
        $region75: #{tpu_custom_call.1} parent=71 // pred_region
          %s1767 = smul.u32 2, %s27
          %s1769 = ssub.s32 512, 512
          %1770 = vsyncadd %s1760, %s1769
          %s1771 = smul.addr %s1767, 128
          %s1772 = scalar_lea.hbm %s13, %s1771
          %s1773 = sshll.u32 %s1763, 4
          %s1774 = int_to_ptr.vmem [resolvable:$true] %s1773
          %1779 = dma.vmem_to_hbm [thread:$0]  %s1774, 512, %s1772, %s1760, 256, 512, 16
        $region76: #{tpu_custom_call.1} parent=71 // pred_fallthru
          _
      $region72: #{tpu_custom_call.1} parent=5 // pred_fallthru
        _
      %p1780 = scmp.le.s32.totalorder 2, %s22
      // Predicated region
      $region77: #{tpu_custom_call.1} parent=5 // pred_check
        %p1781 = pneg %p1780
      $region78: #{tpu_custom_call.1} parent=5 // pred_check_branch
        %1783 = sbr.rel (%p1781) target = $region80
      $region79: #{tpu_custom_call.1} parent=5 // pred_region
        %s1784 = ssub.s32 %s22, 2
        // Predicated region
        $region81: #{tpu_custom_call.1} parent=79 // pred_check
          %p1785 = pneg %p329
        $region82: #{tpu_custom_call.1} parent=79 // pred_check_branch
          %1787 = sbr.rel (%p1785) target = $region84
        $region83: #{tpu_custom_call.1} parent=79 // pred_region
          %s1788 = sand.u32 %s314, 1
          %s1789 = scalar_lea.sflag [#allocation3], %s1788
          %s1790 = sand.u32 %s314, 1
          %s1791 = smul.addr %s1790, 32
          %s1792 = scalar_lea.vmem [#allocation2], %s1791
          %1793 = dma.done %s1789, 512
        $region84: #{tpu_custom_call.1} parent=79 // pred_fallthru
          _
      $region80: #{tpu_custom_call.1} parent=5 // pred_fallthru
        _
    $region6: #{tpu_custom_call.1} parent=1 // loop_footer
      %s26 = sadd.s32 1, %s22
    $region7: #{tpu_custom_call.1} parent=1 // loop_footer_branch
      %21 = sbr.rel target = $region3
    $region8: #{tpu_custom_call.1} parent=1 // loop_exit
      _
    %1794 = vsyncpa [#allocation3], 1
    %s1795 = scalar_lea.sflag [#allocation3], 1
    %1796 = vsyncpa %s1795, 1

</llo_original>
